<compile_context>
chip_gen: v6e
topology: v6e:2x2x1
jax: 0.10.0
libtpu: 0.0.40
codegen_flags: <defaults>
</compile_context>

<pallas_src>
import functools

import jax
import jax.numpy as jnp
from jax.experimental import pallas as pl
from jax.experimental.pallas import tpu as pltpu

INPUT_SIZE = 5      # len(['Close','Open','High','Low','Volume'])
HIDDEN_SIZE = 50
NUM_LAYERS = 1      # single layer (dropout inside nn.LSTM is a no-op for 1 layer)
GATE_PAD = 128      # each LSTM gate padded to one 128-lane tile
SUBLANE = 8         # batch padded to a full sublane tile


def make_lstm_fc_kernel(T, Bp):
    """Builds the kernel for static (T, padded-batch) shapes."""
    GP = GATE_PAD

    def kernel(x_ref, w_ih_ref, w_hh_ref, b_ref, w_fc_ref, b_fc_ref, out_ref):
        # x_ref    : (T*Bp, D_in)   time-major, batch padded to Bp
        # w_ih_ref : (D_in, 4*GP)   gate g lives in columns [g*GP, g*GP+H), rest zero
        # w_hh_ref : (GP, 4*GP)     rows [H, GP) zero, gate-padded columns as above
        # b_ref    : (1, 4*GP)      (b_ih + b_hh), gate-padded
        # w_fc_ref : (GP, GP)       fc.weight.T padded (rows [H,GP)=0, cols [D_out,GP)=0)
        # b_fc_ref : (1, GP)
        # out_ref  : (Bp, GP)       valid data in [:B, :D_out]
        w_hh = w_hh_ref[...]

        # Hoisted input projection: one MXU matmul for all timesteps + single
        # bias broadcast (no loop-carried dependency).
        gx = (jnp.dot(x_ref[...], w_ih_ref[...], preferred_element_type=jnp.float32)
              + b_ref[...])                                        # (T*Bp, 4*GP)

        h = jnp.zeros((Bp, GP), jnp.float32)
        c = jnp.zeros((Bp, GP), jnp.float32)

        # Fully unrolled recurrence (T is small and compile-time static).
        for t in range(T):
            gates = gx[t * Bp:(t + 1) * Bp, :] + jnp.dot(
                h, w_hh, preferred_element_type=jnp.float32)       # (Bp, 4*GP)
            # Lane-aligned gate slices; PyTorch gate order i, f, g, o.
            i_g = jax.nn.sigmoid(gates[:, 0 * GP:1 * GP])
            f_g = jax.nn.sigmoid(gates[:, 1 * GP:2 * GP])
            g_g = jnp.tanh(gates[:, 2 * GP:3 * GP])
            o_g = jax.nn.sigmoid(gates[:, 3 * GP:4 * GP])
            # Padded lanes: weights/bias are zero there -> gates=0, g=0, so
            # c/h stay exactly zero in the pad region (verified analytically).
            c = f_g * c + i_g * g_g
            h = o_g * jnp.tanh(c)

        # Dropout is identity in eval/inference mode.
        # TODO(synk): add stochastic dropout via pltpu.prng_random_bits if training semantics are needed.
        out_ref[...] = (jnp.dot(h, w_fc_ref[...], preferred_element_type=jnp.float32)
                        + b_fc_ref[...])

    return kernel


def lstm_model_forward(x, params):
    """x: (B, T, D_in) float32, batch_first like PyTorch. Returns (B, D_out)."""
    B, T, D_in = x.shape
    H = HIDDEN_SIZE
    D_out = INPUT_SIZE
    GP = GATE_PAD
    Bp = ((B + SUBLANE - 1) // SUBLANE) * SUBLANE

    # Time-major + batch padded to a sublane tile, then flattened so the kernel
    # can project all timesteps with a single matmul.
    x_tm = jnp.transpose(x, (1, 0, 2))                              # (T, B, D_in)
    x_tm = jnp.pad(x_tm, ((0, 0), (0, Bp - B), (0, 0)))             # (T, Bp, D_in)
    x_flat = x_tm.reshape(T * Bp, D_in)                             # (T*Bp, D_in)

    # Pad each gate to its own 128-lane tile: gate g -> columns [g*GP, g*GP+H).
    def pad_gate_cols(w_t):  # (K, 4*H) -> (K, 4*GP)
        K = w_t.shape[0]
        out = jnp.zeros((K, 4 * GP), jnp.float32)
        for g in range(4):
            out = out.at[:, g * GP:g * GP + H].set(w_t[:, g * H:(g + 1) * H])
        return out

    w_ih_p = pad_gate_cols(params["w_ih"].T)                        # (D_in, 4*GP)
    w_hh_p = jnp.zeros((GP, 4 * GP), jnp.float32)
    w_hh_p = w_hh_p.at[:H, :].set(pad_gate_cols(params["w_hh"].T))  # (GP, 4*GP)
    b_p = pad_gate_cols((params["b_ih"] + params["b_hh"]).reshape(1, 4 * H))  # (1, 4*GP)

    w_fc_p = jnp.zeros((GP, GP), jnp.float32)
    w_fc_p = w_fc_p.at[:H, :D_out].set(params["w_fc"].T)            # (GP, GP)
    b_fc_p = jnp.zeros((1, GP), jnp.float32).at[0, :D_out].set(params["b_fc"])

    vmem = pl.BlockSpec(memory_space=pltpu.MemorySpace.VMEM)

    out_padded = pl.pallas_call(
        make_lstm_fc_kernel(T, Bp),
        out_shape=jax.ShapeDtypeStruct((Bp, GP), jnp.float32),
        in_specs=[vmem] * 6,
        out_specs=vmem,
        compiler_params=pltpu.CompilerParams(vmem_limit_bytes=4 * 1024 * 1024),
    )(x_flat, w_ih_p, w_hh_p, b_p, w_fc_p, b_fc_p)

    return out_padded[:B, :D_out]


def init_params(key):
    """Deterministic init matching PyTorch nn.LSTM / nn.Linear parameter shapes."""
    H, D_in, D_out = HIDDEN_SIZE, INPUT_SIZE, INPUT_SIZE
    k = 1.0 / jnp.sqrt(jnp.float32(H))
    keys = jax.random.split(key, 6)
    u = lambda kk, shape: jax.random.uniform(kk, shape, jnp.float32, minval=-k, maxval=k)
    return {
        "w_ih": u(keys[0], (4 * H, D_in)),   # weight_ih_l0
        "w_hh": u(keys[1], (4 * H, H)),      # weight_hh_l0
        "b_ih": u(keys[2], (4 * H,)),        # bias_ih_l0
        "b_hh": u(keys[3], (4 * H,)),        # bias_hh_l0
        "w_fc": u(keys[4], (D_out, H)),      # fc.weight
        "b_fc": u(keys[5], (D_out,)),        # fc.bias
    }


def reference_forward(x, params):
    """Pure-JAX reference of the PyTorch forward (eval mode)."""
    H = HIDDEN_SIZE
    B, T, _ = x.shape
    h = jnp.zeros((B, H), jnp.float32)
    c = jnp.zeros((B, H), jnp.float32)
    b = params["b_ih"] + params["b_hh"]
    for t in range(T):
        gates = x[:, t, :] @ params["w_ih"].T + h @ params["w_hh"].T + b
        i_g = jax.nn.sigmoid(gates[:, 0:H])
        f_g = jax.nn.sigmoid(gates[:, H:2 * H])
        g_g = jnp.tanh(gates[:, 2 * H:3 * H])
        o_g = jax.nn.sigmoid(gates[:, 3 * H:4 * H])
        c = f_g * c + i_g * g_g
        h = o_g * jnp.tanh(c)
    return h @ params["w_fc"].T + params["b_fc"]


if __name__ == "__main__":
    key = jax.random.PRNGKey(0)
    pkey, xkey = jax.random.split(key)

    params = init_params(pkey)

    B, T = 2, 8
    x = jax.random.normal(xkey, (B, T, INPUT_SIZE), jnp.float32)

    out = lstm_model_forward(x, params)
    out = jax.block_until_ready(out)

    ref = reference_forward(x, params)
    assert out.shape == (B, INPUT_SIZE)
    assert jnp.allclose(out, ref, atol=1e-4, rtol=1e-4), "Pallas kernel mismatch vs reference"

    print("KERNEL_OK")
</pallas_src>

<mosaic_0001>
module attributes {stable_mosaic.version = 11 : i64} {
  func.func @kernel(%arg0: memref<64x5xf32, #tpu.memory_space<vmem>>, %arg1: memref<5x512xf32, #tpu.memory_space<vmem>>, %arg2: memref<128x512xf32, #tpu.memory_space<vmem>>, %arg3: memref<1x512xf32, #tpu.memory_space<vmem>>, %arg4: memref<128x128xf32, #tpu.memory_space<vmem>>, %arg5: memref<1x128xf32, #tpu.memory_space<vmem>>, %arg6: memref<8x128xf32, #tpu.memory_space<vmem>>) attributes {dimension_semantics = [], scalar_prefetch = 0 : i64, scratch_operands = 0 : i64, tpu.core_type = #tpu.core_type<tc>} {
    %c0 = arith.constant 0 : index
    %c0_0 = arith.constant 0 : index
    %0 = vector.load %arg2[%c0, %c0_0] : memref<128x512xf32, #tpu.memory_space<vmem>>, vector<128x512xf32>
    %c0_1 = arith.constant 0 : index
    %c0_2 = arith.constant 0 : index
    %1 = vector.load %arg0[%c0_1, %c0_2] : memref<64x5xf32, #tpu.memory_space<vmem>>, vector<64x5xf32>
    %c0_3 = arith.constant 0 : index
    %c0_4 = arith.constant 0 : index
    %2 = vector.load %arg1[%c0_3, %c0_4] : memref<5x512xf32, #tpu.memory_space<vmem>>, vector<5x512xf32>
    %cst = arith.constant dense<0.000000e+00> : vector<64x512xf32>
    %3 = tpu.matmul %1, %2, %cst {dimension_numbers = #tpu.dot_dimension_numbers<[1], [0], [0], [1], [0, 0, 1, 1], [], []>} : vector<64x5xf32>, vector<5x512xf32>, vector<64x512xf32> -> vector<64x512xf32>
    %c0_5 = arith.constant 0 : index
    %c0_6 = arith.constant 0 : index
    %4 = vector.load %arg3[%c0_5, %c0_6] : memref<1x512xf32, #tpu.memory_space<vmem>>, vector<1x512xf32>
    %5 = vector.broadcast %4 : vector<1x512xf32> to vector<64x512xf32>
    %6 = arith.addf %3, %5 : vector<64x512xf32>
    %cst_7 = arith.constant 0.000000e+00 : f32
    %7 = vector.broadcast %cst_7 : f32 to vector<8x128xf32>
    %cst_8 = arith.constant 0.000000e+00 : f32
    %8 = vector.broadcast %cst_8 : f32 to vector<8x128xf32>
    %9 = vector.extract_strided_slice %6 {offsets = [0, 0], sizes = [8, 512], strides = [1, 1]} : vector<64x512xf32> to vector<8x512xf32>
    %cst_9 = arith.constant dense<0.000000e+00> : vector<8x512xf32>
    %10 = tpu.matmul %7, %0, %cst_9 {dimension_numbers = #tpu.dot_dimension_numbers<[1], [0], [0], [1], [0, 0, 1, 1], [], []>} : vector<8x128xf32>, vector<128x512xf32>, vector<8x512xf32> -> vector<8x512xf32>
    %11 = arith.addf %9, %10 : vector<8x512xf32>
    %12 = vector.extract_strided_slice %11 {offsets = [0, 0], sizes = [8, 128], strides = [1, 1]} : vector<8x512xf32> to vector<8x128xf32>
    %13 = arith.negf %12 : vector<8x128xf32>
    %14 = math.exp %13 : vector<8x128xf32>
    %cst_10 = arith.constant 1.000000e+00 : f32
    %15 = vector.broadcast %cst_10 : f32 to vector<8x128xf32>
    %16 = arith.addf %15, %14 : vector<8x128xf32>
    %17 = arith.divf %15, %16 : vector<8x128xf32>
    %18 = vector.extract_strided_slice %11 {offsets = [0, 128], sizes = [8, 128], strides = [1, 1]} : vector<8x512xf32> to vector<8x128xf32>
    %19 = arith.negf %18 : vector<8x128xf32>
    %20 = math.exp %19 : vector<8x128xf32>
    %cst_11 = arith.constant 1.000000e+00 : f32
    %21 = vector.broadcast %cst_11 : f32 to vector<8x128xf32>
    %22 = arith.addf %21, %20 : vector<8x128xf32>
    %23 = arith.divf %21, %22 : vector<8x128xf32>
    %24 = vector.extract_strided_slice %11 {offsets = [0, 256], sizes = [8, 128], strides = [1, 1]} : vector<8x512xf32> to vector<8x128xf32>
    %25 = math.tanh %24 : vector<8x128xf32>
    %26 = vector.extract_strided_slice %11 {offsets = [0, 384], sizes = [8, 128], strides = [1, 1]} : vector<8x512xf32> to vector<8x128xf32>
    %27 = arith.negf %26 : vector<8x128xf32>
    %28 = math.exp %27 : vector<8x128xf32>
    %cst_12 = arith.constant 1.000000e+00 : f32
    %29 = vector.broadcast %cst_12 : f32 to vector<8x128xf32>
    %30 = arith.addf %29, %28 : vector<8x128xf32>
    %31 = arith.divf %29, %30 : vector<8x128xf32>
    %32 = arith.mulf %23, %8 : vector<8x128xf32>
    %33 = arith.mulf %17, %25 : vector<8x128xf32>
    %34 = arith.addf %32, %33 : vector<8x128xf32>
    %35 = math.tanh %34 : vector<8x128xf32>
    %36 = arith.mulf %31, %35 : vector<8x128xf32>
    %37 = vector.extract_strided_slice %6 {offsets = [8, 0], sizes = [8, 512], strides = [1, 1]} : vector<64x512xf32> to vector<8x512xf32>
    %cst_13 = arith.constant dense<0.000000e+00> : vector<8x512xf32>
    %38 = tpu.matmul %36, %0, %cst_13 {dimension_numbers = #tpu.dot_dimension_numbers<[1], [0], [0], [1], [0, 0, 1, 1], [], []>} : vector<8x128xf32>, vector<128x512xf32>, vector<8x512xf32> -> vector<8x512xf32>
    %39 = arith.addf %37, %38 : vector<8x512xf32>
    %40 = vector.extract_strided_slice %39 {offsets = [0, 0], sizes = [8, 128], strides = [1, 1]} : vector<8x512xf32> to vector<8x128xf32>
    %41 = arith.negf %40 : vector<8x128xf32>
    %42 = math.exp %41 : vector<8x128xf32>
    %cst_14 = arith.constant 1.000000e+00 : f32
    %43 = vector.broadcast %cst_14 : f32 to vector<8x128xf32>
    %44 = arith.addf %43, %42 : vector<8x128xf32>
    %45 = arith.divf %43, %44 : vector<8x128xf32>
    %46 = vector.extract_strided_slice %39 {offsets = [0, 128], sizes = [8, 128], strides = [1, 1]} : vector<8x512xf32> to vector<8x128xf32>
    %47 = arith.negf %46 : vector<8x128xf32>
    %48 = math.exp %47 : vector<8x128xf32>
    %cst_15 = arith.constant 1.000000e+00 : f32
    %49 = vector.broadcast %cst_15 : f32 to vector<8x128xf32>
    %50 = arith.addf %49, %48 : vector<8x128xf32>
    %51 = arith.divf %49, %50 : vector<8x128xf32>
    %52 = vector.extract_strided_slice %39 {offsets = [0, 256], sizes = [8, 128], strides = [1, 1]} : vector<8x512xf32> to vector<8x128xf32>
    %53 = math.tanh %52 : vector<8x128xf32>
    %54 = vector.extract_strided_slice %39 {offsets = [0, 384], sizes = [8, 128], strides = [1, 1]} : vector<8x512xf32> to vector<8x128xf32>
    %55 = arith.negf %54 : vector<8x128xf32>
    %56 = math.exp %55 : vector<8x128xf32>
    %cst_16 = arith.constant 1.000000e+00 : f32
    %57 = vector.broadcast %cst_16 : f32 to vector<8x128xf32>
    %58 = arith.addf %57, %56 : vector<8x128xf32>
    %59 = arith.divf %57, %58 : vector<8x128xf32>
    %60 = arith.mulf %51, %34 : vector<8x128xf32>
    %61 = arith.mulf %45, %53 : vector<8x128xf32>
    %62 = arith.addf %60, %61 : vector<8x128xf32>
    %63 = math.tanh %62 : vector<8x128xf32>
    %64 = arith.mulf %59, %63 : vector<8x128xf32>
    %65 = vector.extract_strided_slice %6 {offsets = [16, 0], sizes = [8, 512], strides = [1, 1]} : vector<64x512xf32> to vector<8x512xf32>
    %cst_17 = arith.constant dense<0.000000e+00> : vector<8x512xf32>
    %66 = tpu.matmul %64, %0, %cst_17 {dimension_numbers = #tpu.dot_dimension_numbers<[1], [0], [0], [1], [0, 0, 1, 1], [], []>} : vector<8x128xf32>, vector<128x512xf32>, vector<8x512xf32> -> vector<8x512xf32>
    %67 = arith.addf %65, %66 : vector<8x512xf32>
    %68 = vector.extract_strided_slice %67 {offsets = [0, 0], sizes = [8, 128], strides = [1, 1]} : vector<8x512xf32> to vector<8x128xf32>
    %69 = arith.negf %68 : vector<8x128xf32>
    %70 = math.exp %69 : vector<8x128xf32>
    %cst_18 = arith.constant 1.000000e+00 : f32
    %71 = vector.broadcast %cst_18 : f32 to vector<8x128xf32>
    %72 = arith.addf %71, %70 : vector<8x128xf32>
    %73 = arith.divf %71, %72 : vector<8x128xf32>
    %74 = vector.extract_strided_slice %67 {offsets = [0, 128], sizes = [8, 128], strides = [1, 1]} : vector<8x512xf32> to vector<8x128xf32>
    %75 = arith.negf %74 : vector<8x128xf32>
    %76 = math.exp %75 : vector<8x128xf32>
    %cst_19 = arith.constant 1.000000e+00 : f32
    %77 = vector.broadcast %cst_19 : f32 to vector<8x128xf32>
    %78 = arith.addf %77, %76 : vector<8x128xf32>
    %79 = arith.divf %77, %78 : vector<8x128xf32>
    %80 = vector.extract_strided_slice %67 {offsets = [0, 256], sizes = [8, 128], strides = [1, 1]} : vector<8x512xf32> to vector<8x128xf32>
    %81 = math.tanh %80 : vector<8x128xf32>
    %82 = vector.extract_strided_slice %67 {offsets = [0, 384], sizes = [8, 128], strides = [1, 1]} : vector<8x512xf32> to vector<8x128xf32>
    %83 = arith.negf %82 : vector<8x128xf32>
    %84 = math.exp %83 : vector<8x128xf32>
    %cst_20 = arith.constant 1.000000e+00 : f32
    %85 = vector.broadcast %cst_20 : f32 to vector<8x128xf32>
    %86 = arith.addf %85, %84 : vector<8x128xf32>
    %87 = arith.divf %85, %86 : vector<8x128xf32>
    %88 = arith.mulf %79, %62 : vector<8x128xf32>
    %89 = arith.mulf %73, %81 : vector<8x128xf32>
    %90 = arith.addf %88, %89 : vector<8x128xf32>
    %91 = math.tanh %90 : vector<8x128xf32>
    %92 = arith.mulf %87, %91 : vector<8x128xf32>
    %93 = vector.extract_strided_slice %6 {offsets = [24, 0], sizes = [8, 512], strides = [1, 1]} : vector<64x512xf32> to vector<8x512xf32>
    %cst_21 = arith.constant dense<0.000000e+00> : vector<8x512xf32>
    %94 = tpu.matmul %92, %0, %cst_21 {dimension_numbers = #tpu.dot_dimension_numbers<[1], [0], [0], [1], [0, 0, 1, 1], [], []>} : vector<8x128xf32>, vector<128x512xf32>, vector<8x512xf32> -> vector<8x512xf32>
    %95 = arith.addf %93, %94 : vector<8x512xf32>
    %96 = vector.extract_strided_slice %95 {offsets = [0, 0], sizes = [8, 128], strides = [1, 1]} : vector<8x512xf32> to vector<8x128xf32>
    %97 = arith.negf %96 : vector<8x128xf32>
    %98 = math.exp %97 : vector<8x128xf32>
    %cst_22 = arith.constant 1.000000e+00 : f32
    %99 = vector.broadcast %cst_22 : f32 to vector<8x128xf32>
    %100 = arith.addf %99, %98 : vector<8x128xf32>
    %101 = arith.divf %99, %100 : vector<8x128xf32>
    %102 = vector.extract_strided_slice %95 {offsets = [0, 128], sizes = [8, 128], strides = [1, 1]} : vector<8x512xf32> to vector<8x128xf32>
    %103 = arith.negf %102 : vector<8x128xf32>
    %104 = math.exp %103 : vector<8x128xf32>
    %cst_23 = arith.constant 1.000000e+00 : f32
    %105 = vector.broadcast %cst_23 : f32 to vector<8x128xf32>
    %106 = arith.addf %105, %104 : vector<8x128xf32>
    %107 = arith.divf %105, %106 : vector<8x128xf32>
    %108 = vector.extract_strided_slice %95 {offsets = [0, 256], sizes = [8, 128], strides = [1, 1]} : vector<8x512xf32> to vector<8x128xf32>
    %109 = math.tanh %108 : vector<8x128xf32>
    %110 = vector.extract_strided_slice %95 {offsets = [0, 384], sizes = [8, 128], strides = [1, 1]} : vector<8x512xf32> to vector<8x128xf32>
    %111 = arith.negf %110 : vector<8x128xf32>
    %112 = math.exp %111 : vector<8x128xf32>
    %cst_24 = arith.constant 1.000000e+00 : f32
    %113 = vector.broadcast %cst_24 : f32 to vector<8x128xf32>
    %114 = arith.addf %113, %112 : vector<8x128xf32>
    %115 = arith.divf %113, %114 : vector<8x128xf32>
    %116 = arith.mulf %107, %90 : vector<8x128xf32>
    %117 = arith.mulf %101, %109 : vector<8x128xf32>
    %118 = arith.addf %116, %117 : vector<8x128xf32>
    %119 = math.tanh %118 : vector<8x128xf32>
    %120 = arith.mulf %115, %119 : vector<8x128xf32>
    %121 = vector.extract_strided_slice %6 {offsets = [32, 0], sizes = [8, 512], strides = [1, 1]} : vector<64x512xf32> to vector<8x512xf32>
    %cst_25 = arith.constant dense<0.000000e+00> : vector<8x512xf32>
    %122 = tpu.matmul %120, %0, %cst_25 {dimension_numbers = #tpu.dot_dimension_numbers<[1], [0], [0], [1], [0, 0, 1, 1], [], []>} : vector<8x128xf32>, vector<128x512xf32>, vector<8x512xf32> -> vector<8x512xf32>
    %123 = arith.addf %121, %122 : vector<8x512xf32>
    %124 = vector.extract_strided_slice %123 {offsets = [0, 0], sizes = [8, 128], strides = [1, 1]} : vector<8x512xf32> to vector<8x128xf32>
    %125 = arith.negf %124 : vector<8x128xf32>
    %126 = math.exp %125 : vector<8x128xf32>
    %cst_26 = arith.constant 1.000000e+00 : f32
    %127 = vector.broadcast %cst_26 : f32 to vector<8x128xf32>
    %128 = arith.addf %127, %126 : vector<8x128xf32>
    %129 = arith.divf %127, %128 : vector<8x128xf32>
    %130 = vector.extract_strided_slice %123 {offsets = [0, 128], sizes = [8, 128], strides = [1, 1]} : vector<8x512xf32> to vector<8x128xf32>
    %131 = arith.negf %130 : vector<8x128xf32>
    %132 = math.exp %131 : vector<8x128xf32>
    %cst_27 = arith.constant 1.000000e+00 : f32
    %133 = vector.broadcast %cst_27 : f32 to vector<8x128xf32>
    %134 = arith.addf %133, %132 : vector<8x128xf32>
    %135 = arith.divf %133, %134 : vector<8x128xf32>
    %136 = vector.extract_strided_slice %123 {offsets = [0, 256], sizes = [8, 128], strides = [1, 1]} : vector<8x512xf32> to vector<8x128xf32>
    %137 = math.tanh %136 : vector<8x128xf32>
    %138 = vector.extract_strided_slice %123 {offsets = [0, 384], sizes = [8, 128], strides = [1, 1]} : vector<8x512xf32> to vector<8x128xf32>
    %139 = arith.negf %138 : vector<8x128xf32>
    %140 = math.exp %139 : vector<8x128xf32>
    %cst_28 = arith.constant 1.000000e+00 : f32
    %141 = vector.broadcast %cst_28 : f32 to vector<8x128xf32>
    %142 = arith.addf %141, %140 : vector<8x128xf32>
    %143 = arith.divf %141, %142 : vector<8x128xf32>
    %144 = arith.mulf %135, %118 : vector<8x128xf32>
    %145 = arith.mulf %129, %137 : vector<8x128xf32>
    %146 = arith.addf %144, %145 : vector<8x128xf32>
    %147 = math.tanh %146 : vector<8x128xf32>
    %148 = arith.mulf %143, %147 : vector<8x128xf32>
    %149 = vector.extract_strided_slice %6 {offsets = [40, 0], sizes = [8, 512], strides = [1, 1]} : vector<64x512xf32> to vector<8x512xf32>
    %cst_29 = arith.constant dense<0.000000e+00> : vector<8x512xf32>
    %150 = tpu.matmul %148, %0, %cst_29 {dimension_numbers = #tpu.dot_dimension_numbers<[1], [0], [0], [1], [0, 0, 1, 1], [], []>} : vector<8x128xf32>, vector<128x512xf32>, vector<8x512xf32> -> vector<8x512xf32>
    %151 = arith.addf %149, %150 : vector<8x512xf32>
    %152 = vector.extract_strided_slice %151 {offsets = [0, 0], sizes = [8, 128], strides = [1, 1]} : vector<8x512xf32> to vector<8x128xf32>
    %153 = arith.negf %152 : vector<8x128xf32>
    %154 = math.exp %153 : vector<8x128xf32>
    %cst_30 = arith.constant 1.000000e+00 : f32
    %155 = vector.broadcast %cst_30 : f32 to vector<8x128xf32>
    %156 = arith.addf %155, %154 : vector<8x128xf32>
    %157 = arith.divf %155, %156 : vector<8x128xf32>
    %158 = vector.extract_strided_slice %151 {offsets = [0, 128], sizes = [8, 128], strides = [1, 1]} : vector<8x512xf32> to vector<8x128xf32>
    %159 = arith.negf %158 : vector<8x128xf32>
    %160 = math.exp %159 : vector<8x128xf32>
    %cst_31 = arith.constant 1.000000e+00 : f32
    %161 = vector.broadcast %cst_31 : f32 to vector<8x128xf32>
    %162 = arith.addf %161, %160 : vector<8x128xf32>
    %163 = arith.divf %161, %162 : vector<8x128xf32>
    %164 = vector.extract_strided_slice %151 {offsets = [0, 256], sizes = [8, 128], strides = [1, 1]} : vector<8x512xf32> to vector<8x128xf32>
    %165 = math.tanh %164 : vector<8x128xf32>
    %166 = vector.extract_strided_slice %151 {offsets = [0, 384], sizes = [8, 128], strides = [1, 1]} : vector<8x512xf32> to vector<8x128xf32>
    %167 = arith.negf %166 : vector<8x128xf32>
    %168 = math.exp %167 : vector<8x128xf32>
    %cst_32 = arith.constant 1.000000e+00 : f32
    %169 = vector.broadcast %cst_32 : f32 to vector<8x128xf32>
    %170 = arith.addf %169, %168 : vector<8x128xf32>
    %171 = arith.divf %169, %170 : vector<8x128xf32>
    %172 = arith.mulf %163, %146 : vector<8x128xf32>
    %173 = arith.mulf %157, %165 : vector<8x128xf32>
    %174 = arith.addf %172, %173 : vector<8x128xf32>
    %175 = math.tanh %174 : vector<8x128xf32>
    %176 = arith.mulf %171, %175 : vector<8x128xf32>
    %177 = vector.extract_strided_slice %6 {offsets = [48, 0], sizes = [8, 512], strides = [1, 1]} : vector<64x512xf32> to vector<8x512xf32>
    %cst_33 = arith.constant dense<0.000000e+00> : vector<8x512xf32>
    %178 = tpu.matmul %176, %0, %cst_33 {dimension_numbers = #tpu.dot_dimension_numbers<[1], [0], [0], [1], [0, 0, 1, 1], [], []>} : vector<8x128xf32>, vector<128x512xf32>, vector<8x512xf32> -> vector<8x512xf32>
    %179 = arith.addf %177, %178 : vector<8x512xf32>
    %180 = vector.extract_strided_slice %179 {offsets = [0, 0], sizes = [8, 128], strides = [1, 1]} : vector<8x512xf32> to vector<8x128xf32>
    %181 = arith.negf %180 : vector<8x128xf32>
    %182 = math.exp %181 : vector<8x128xf32>
    %cst_34 = arith.constant 1.000000e+00 : f32
    %183 = vector.broadcast %cst_34 : f32 to vector<8x128xf32>
    %184 = arith.addf %183, %182 : vector<8x128xf32>
    %185 = arith.divf %183, %184 : vector<8x128xf32>
    %186 = vector.extract_strided_slice %179 {offsets = [0, 128], sizes = [8, 128], strides = [1, 1]} : vector<8x512xf32> to vector<8x128xf32>
    %187 = arith.negf %186 : vector<8x128xf32>
    %188 = math.exp %187 : vector<8x128xf32>
    %cst_35 = arith.constant 1.000000e+00 : f32
    %189 = vector.broadcast %cst_35 : f32 to vector<8x128xf32>
    %190 = arith.addf %189, %188 : vector<8x128xf32>
    %191 = arith.divf %189, %190 : vector<8x128xf32>
    %192 = vector.extract_strided_slice %179 {offsets = [0, 256], sizes = [8, 128], strides = [1, 1]} : vector<8x512xf32> to vector<8x128xf32>
    %193 = math.tanh %192 : vector<8x128xf32>
    %194 = vector.extract_strided_slice %179 {offsets = [0, 384], sizes = [8, 128], strides = [1, 1]} : vector<8x512xf32> to vector<8x128xf32>
    %195 = arith.negf %194 : vector<8x128xf32>
    %196 = math.exp %195 : vector<8x128xf32>
    %cst_36 = arith.constant 1.000000e+00 : f32
    %197 = vector.broadcast %cst_36 : f32 to vector<8x128xf32>
    %198 = arith.addf %197, %196 : vector<8x128xf32>
    %199 = arith.divf %197, %198 : vector<8x128xf32>
    %200 = arith.mulf %191, %174 : vector<8x128xf32>
    %201 = arith.mulf %185, %193 : vector<8x128xf32>
    %202 = arith.addf %200, %201 : vector<8x128xf32>
    %203 = math.tanh %202 : vector<8x128xf32>
    %204 = arith.mulf %199, %203 : vector<8x128xf32>
    %205 = vector.extract_strided_slice %6 {offsets = [56, 0], sizes = [8, 512], strides = [1, 1]} : vector<64x512xf32> to vector<8x512xf32>
    %cst_37 = arith.constant dense<0.000000e+00> : vector<8x512xf32>
    %206 = tpu.matmul %204, %0, %cst_37 {dimension_numbers = #tpu.dot_dimension_numbers<[1], [0], [0], [1], [0, 0, 1, 1], [], []>} : vector<8x128xf32>, vector<128x512xf32>, vector<8x512xf32> -> vector<8x512xf32>
    %207 = arith.addf %205, %206 : vector<8x512xf32>
    %208 = vector.extract_strided_slice %207 {offsets = [0, 0], sizes = [8, 128], strides = [1, 1]} : vector<8x512xf32> to vector<8x128xf32>
    %209 = arith.negf %208 : vector<8x128xf32>
    %210 = math.exp %209 : vector<8x128xf32>
    %cst_38 = arith.constant 1.000000e+00 : f32
    %211 = vector.broadcast %cst_38 : f32 to vector<8x128xf32>
    %212 = arith.addf %211, %210 : vector<8x128xf32>
    %213 = arith.divf %211, %212 : vector<8x128xf32>
    %214 = vector.extract_strided_slice %207 {offsets = [0, 128], sizes = [8, 128], strides = [1, 1]} : vector<8x512xf32> to vector<8x128xf32>
    %215 = arith.negf %214 : vector<8x128xf32>
    %216 = math.exp %215 : vector<8x128xf32>
    %cst_39 = arith.constant 1.000000e+00 : f32
    %217 = vector.broadcast %cst_39 : f32 to vector<8x128xf32>
    %218 = arith.addf %217, %216 : vector<8x128xf32>
    %219 = arith.divf %217, %218 : vector<8x128xf32>
    %220 = vector.extract_strided_slice %207 {offsets = [0, 256], sizes = [8, 128], strides = [1, 1]} : vector<8x512xf32> to vector<8x128xf32>
    %221 = math.tanh %220 : vector<8x128xf32>
    %222 = vector.extract_strided_slice %207 {offsets = [0, 384], sizes = [8, 128], strides = [1, 1]} : vector<8x512xf32> to vector<8x128xf32>
    %223 = arith.negf %222 : vector<8x128xf32>
    %224 = math.exp %223 : vector<8x128xf32>
    %cst_40 = arith.constant 1.000000e+00 : f32
    %225 = vector.broadcast %cst_40 : f32 to vector<8x128xf32>
    %226 = arith.addf %225, %224 : vector<8x128xf32>
    %227 = arith.divf %225, %226 : vector<8x128xf32>
    %228 = arith.mulf %219, %202 : vector<8x128xf32>
    %229 = arith.mulf %213, %221 : vector<8x128xf32>
    %230 = arith.addf %228, %229 : vector<8x128xf32>
    %231 = math.tanh %230 : vector<8x128xf32>
    %232 = arith.mulf %227, %231 : vector<8x128xf32>
    %c0_41 = arith.constant 0 : index
    %c0_42 = arith.constant 0 : index
    %233 = vector.load %arg4[%c0_41, %c0_42] : memref<128x128xf32, #tpu.memory_space<vmem>>, vector<128x128xf32>
    %cst_43 = arith.constant dense<0.000000e+00> : vector<8x128xf32>
    %234 = tpu.matmul %232, %233, %cst_43 {dimension_numbers = #tpu.dot_dimension_numbers<[1], [0], [0], [1], [0, 0, 1, 1], [], []>} : vector<8x128xf32>, vector<128x128xf32>, vector<8x128xf32> -> vector<8x128xf32>
    %c0_44 = arith.constant 0 : index
    %c0_45 = arith.constant 0 : index
    %235 = vector.load %arg5[%c0_44, %c0_45] : memref<1x128xf32, #tpu.memory_space<vmem>>, vector<1x128xf32>
    %236 = vector.broadcast %235 : vector<1x128xf32> to vector<8x128xf32>
    %237 = arith.addf %234, %236 : vector<8x128xf32>
    %c0_46 = arith.constant 0 : index
    %c0_47 = arith.constant 0 : index
    %238 = vector.load %arg6[%c0_46, %c0_47] : memref<8x128xf32, #tpu.memory_space<vmem>>, vector<8x128xf32>
    tpu.vector_store %arg6[%c0_46, %c0_47], %237 {strides = array<i32>} : memref<8x128xf32, #tpu.memory_space<vmem>>, vector<8x128xf32>,
    return
  }
}

</mosaic_0001>

<llo_original>
// kernel: tpu_custom_call.1
$region0: #{tpu_custom_call.1}
  #allocation0 [shape = 'u32[]', space=smem, size = 0x4, offset = 0x4, fixed_abs, tag = 'smem constant byte address 0x4 - core index']
  #allocation1 [shape = 'u32[144,128]{1,0:T(1,128)}', space=vmem, size = 0x12000, scoped, tag = 'internal scratch']
  %s0 = inlined_call_operand.vmem [shape: f32[64,5], index: 0, kind: input, shape index: {}]
  %s1 = inlined_call_operand.vmem [shape: f32[5,512], index: 1, kind: input, shape index: {}]
  %s2 = inlined_call_operand.hbm [shape: f32[128,512], index: 2, kind: input, shape index: {}]
  %s3 = inlined_call_operand.vmem [shape: f32[1,512], index: 3, kind: input, shape index: {}]
  %s4 = inlined_call_operand.hbm [shape: f32[128,128], index: 4, kind: input, shape index: {}]
  %s5 = inlined_call_operand.vmem [shape: f32[1,128], index: 5, kind: input, shape index: {}]
  %s6 = inlined_call_operand.hbm [shape: f32[8,128], index: 6, kind: output, shape index: {}]
  %s7 = sld [smem:[#allocation0]]
  $region42: #{tpu_custom_call.1} parent=0
    _
  %s9 = ssub.s32 1, %s7
  %s10 = scalar_select 0, %s9, %s7
  $region1: #{tpu_custom_call.1} parent=0
    #allocation2 [shape = 'u8[262144]{0}', space=vmem, size = 0x40000, scoped, tag = 'input window, operand 2, single buffered']
    #allocation3 [shape = 's32[1]{0}', space=sflag, size = 0x4, scoped, tag = 'scoped memory for tpu_custom_call.1']
    #allocation4 [shape = 's32[1]{0}', space=sflag, size = 0x4, scoped, tag = 'scoped memory for tpu_custom_call.1']
    #allocation5 [shape = 'u8[65536]{0}', space=vmem, size = 0x10000, scoped, tag = 'input window, operand 4, single buffered']
    #allocation6 [shape = 's32[1]{0}', space=sflag, size = 0x4, scoped, tag = 'scoped memory for tpu_custom_call.1']
    #allocation7 [shape = 'u8[4096]{0}', space=vmem, size = 0x1000, scoped, tag = 'output window, operand 0, single buffered']
    %11 = vsyncpa [#allocation3], 0
    %12 = vsyncpa [#allocation6], 0
    %13 = vsyncpa [#allocation4], 0
    // Predicated region
    $region2: #{tpu_custom_call.1} parent=1 // pred_check
      _
    $region3: #{tpu_custom_call.1} parent=1 // pred_check_branch
      %15 = sbr.rel (0) target = $region5
    $region4: #{tpu_custom_call.1} parent=1 // pred_region
      _
    $region5: #{tpu_custom_call.1} parent=1 // pred_fallthru
      _
    // Predicated region
    $region6: #{tpu_custom_call.1} parent=1 // pred_check
      _
    $region7: #{tpu_custom_call.1} parent=1 // pred_check_branch
      %17 = sbr.rel (0) target = $region9
    $region8: #{tpu_custom_call.1} parent=1 // pred_region
      _
    $region9: #{tpu_custom_call.1} parent=1 // pred_fallthru
      _
    // Predicated region
    $region10: #{tpu_custom_call.1} parent=1 // pred_check
      _
    $region11: #{tpu_custom_call.1} parent=1 // pred_check_branch
      %19 = sbr.rel (0) target = $region13
    $region12: #{tpu_custom_call.1} parent=1 // pred_region
      %s21 = ssub.s32 8192, 8192
      %22 = vsyncadd [#allocation3], %s21
      %s23 = sshll.u32 [#allocation2], 4
      %s24 = int_to_ptr.vmem [resolvable:$true] %s23
      %29 = dma.hbm_to_vmem [thread:$0]  %s2, 8192, %s24, [#allocation3], 512, 512, 32
    $region13: #{tpu_custom_call.1} parent=1 // pred_fallthru
      _
    // Predicated region
    $region14: #{tpu_custom_call.1} parent=1 // pred_check
      _
    $region15: #{tpu_custom_call.1} parent=1 // pred_check_branch
      %31 = sbr.rel (0) target = $region17
    $region16: #{tpu_custom_call.1} parent=1 // pred_region
      _
    $region17: #{tpu_custom_call.1} parent=1 // pred_fallthru
      _
    // Predicated region
    $region18: #{tpu_custom_call.1} parent=1 // pred_check
      _
    $region19: #{tpu_custom_call.1} parent=1 // pred_check_branch
      %33 = sbr.rel (0) target = $region21
    $region20: #{tpu_custom_call.1} parent=1 // pred_region
      %s35 = ssub.s32 2048, 2048
      %36 = vsyncadd [#allocation6], %s35
      %s37 = sshll.u32 [#allocation5], 4
      %s38 = int_to_ptr.vmem [resolvable:$true] %s37
      %43 = dma.hbm_to_vmem [thread:$0]  %s4, 2048, %s38, [#allocation6], 128, 128, 8
    $region21: #{tpu_custom_call.1} parent=1 // pred_fallthru
      _
    // Predicated region
    $region22: #{tpu_custom_call.1} parent=1 // pred_check
      _
    $region23: #{tpu_custom_call.1} parent=1 // pred_check_branch
      %45 = sbr.rel (0) target = $region25
    $region24: #{tpu_custom_call.1} parent=1 // pred_region
      _
    $region25: #{tpu_custom_call.1} parent=1 // pred_fallthru
      _
    // Predicated region
    $region26: #{tpu_custom_call.1} parent=1 // pred_check
      _
    $region27: #{tpu_custom_call.1} parent=1 // pred_check_branch
      %47 = sbr.rel (0) target = $region29
    $region28: #{tpu_custom_call.1} parent=1 // pred_region
      %48 = dma.done [#allocation3], 8192
    $region29: #{tpu_custom_call.1} parent=1 // pred_fallthru
      _
    // Predicated region
    $region30: #{tpu_custom_call.1} parent=1 // pred_check
      _
    $region31: #{tpu_custom_call.1} parent=1 // pred_check_branch
      %50 = sbr.rel (0) target = $region33
    $region32: #{tpu_custom_call.1} parent=1 // pred_region
      %51 = dma.done [#allocation6], 2048
    $region33: #{tpu_custom_call.1} parent=1 // pred_fallthru
      _
    %v52 = vld [vmem:[#allocation2] sm:$0xff]
    %v53 = vld [vmem:[#allocation2 + $0x8] sm:$0xff]
    %v54 = vld [vmem:[#allocation2 + $0x10] sm:$0xff]
    %v55 = vld [vmem:[#allocation2 + $0x18] sm:$0xff]
    %v56 = vld [vmem:[#allocation2 + $0x20] sm:$0xff]
    %v57 = vld [vmem:[#allocation2 + $0x28] sm:$0xff]
    %v58 = vld [vmem:[#allocation2 + $0x30] sm:$0xff]
    %v59 = vld [vmem:[#allocation2 + $0x38] sm:$0xff]
    %v60 = vld [vmem:[#allocation2 + $0x40] sm:$0xff]
    %v61 = vld [vmem:[#allocation2 + $0x48] sm:$0xff]
    %v62 = vld [vmem:[#allocation2 + $0x50] sm:$0xff]
    %v63 = vld [vmem:[#allocation2 + $0x58] sm:$0xff]
    %v64 = vld [vmem:[#allocation2 + $0x60] sm:$0xff]
    %v65 = vld [vmem:[#allocation2 + $0x68] sm:$0xff]
    %v66 = vld [vmem:[#allocation2 + $0x70] sm:$0xff]
    %v67 = vld [vmem:[#allocation2 + $0x78] sm:$0xff]
    %v68 = vld [vmem:[#allocation2 + $0x80] sm:$0xff]
    %v69 = vld [vmem:[#allocation2 + $0x88] sm:$0xff]
    %v70 = vld [vmem:[#allocation2 + $0x90] sm:$0xff]
    %v71 = vld [vmem:[#allocation2 + $0x98] sm:$0xff]
    %v72 = vld [vmem:[#allocation2 + $0xa0] sm:$0xff]
    %v73 = vld [vmem:[#allocation2 + $0xa8] sm:$0xff]
    %v74 = vld [vmem:[#allocation2 + $0xb0] sm:$0xff]
    %v75 = vld [vmem:[#allocation2 + $0xb8] sm:$0xff]
    %v76 = vld [vmem:[#allocation2 + $0xc0] sm:$0xff]
    %v77 = vld [vmem:[#allocation2 + $0xc8] sm:$0xff]
    %v78 = vld [vmem:[#allocation2 + $0xd0] sm:$0xff]
    %v79 = vld [vmem:[#allocation2 + $0xd8] sm:$0xff]
    %v80 = vld [vmem:[#allocation2 + $0xe0] sm:$0xff]
    %v81 = vld [vmem:[#allocation2 + $0xe8] sm:$0xff]
    %v82 = vld [vmem:[#allocation2 + $0xf0] sm:$0xff]
    %v83 = vld [vmem:[#allocation2 + $0xf8] sm:$0xff]
    %v84 = vld [vmem:[#allocation2 + $0x100] sm:$0xff]
    %v85 = vld [vmem:[#allocation2 + $0x108] sm:$0xff]
    %v86 = vld [vmem:[#allocation2 + $0x110] sm:$0xff]
    %v87 = vld [vmem:[#allocation2 + $0x118] sm:$0xff]
    %v88 = vld [vmem:[#allocation2 + $0x120] sm:$0xff]
    %v89 = vld [vmem:[#allocation2 + $0x128] sm:$0xff]
    %v90 = vld [vmem:[#allocation2 + $0x130] sm:$0xff]
    %v91 = vld [vmem:[#allocation2 + $0x138] sm:$0xff]
    %v92 = vld [vmem:[#allocation2 + $0x140] sm:$0xff]
    %v93 = vld [vmem:[#allocation2 + $0x148] sm:$0xff]
    %v94 = vld [vmem:[#allocation2 + $0x150] sm:$0xff]
    %v95 = vld [vmem:[#allocation2 + $0x158] sm:$0xff]
    %v96 = vld [vmem:[#allocation2 + $0x160] sm:$0xff]
    %v97 = vld [vmem:[#allocation2 + $0x168] sm:$0xff]
    %v98 = vld [vmem:[#allocation2 + $0x170] sm:$0xff]
    %v99 = vld [vmem:[#allocation2 + $0x178] sm:$0xff]
    %v100 = vld [vmem:[#allocation2 + $0x180] sm:$0xff]
    %v101 = vld [vmem:[#allocation2 + $0x188] sm:$0xff]
    %v102 = vld [vmem:[#allocation2 + $0x190] sm:$0xff]
    %v103 = vld [vmem:[#allocation2 + $0x198] sm:$0xff]
    %v104 = vld [vmem:[#allocation2 + $0x1a0] sm:$0xff]
    %v105 = vld [vmem:[#allocation2 + $0x1a8] sm:$0xff]
    %v106 = vld [vmem:[#allocation2 + $0x1b0] sm:$0xff]
    %v107 = vld [vmem:[#allocation2 + $0x1b8] sm:$0xff]
    %v108 = vld [vmem:[#allocation2 + $0x1c0] sm:$0xff]
    %v109 = vld [vmem:[#allocation2 + $0x1c8] sm:$0xff]
    %v110 = vld [vmem:[#allocation2 + $0x1d0] sm:$0xff]
    %v111 = vld [vmem:[#allocation2 + $0x1d8] sm:$0xff]
    %v112 = vld [vmem:[#allocation2 + $0x1e0] sm:$0xff]
    %v113 = vld [vmem:[#allocation2 + $0x1e8] sm:$0xff]
    %v114 = vld [vmem:[#allocation2 + $0x1f0] sm:$0xff]
    %v115 = vld [vmem:[#allocation2 + $0x1f8] sm:$0xff]
    %v116 = vld [vmem:[%s0] sm:$0xff]
    %v117 = vld [vmem:[%s0 + $0x8] sm:$0xff]
    %v118 = vld [vmem:[%s0 + $0x10] sm:$0xff]
    %v119 = vld [vmem:[%s0 + $0x18] sm:$0xff]
    %v120 = vld [vmem:[%s0 + $0x20] sm:$0xff]
    %v121 = vld [vmem:[%s0 + $0x28] sm:$0xff]
    %v122 = vld [vmem:[%s0 + $0x30] sm:$0xff]
    %v123 = vld [vmem:[%s0 + $0x38] sm:$0xff]
    %v124 = vld [vmem:[%s1] sm:$0x1f]
    %v125 = vld [vmem:[%s1 + $0x8] sm:$0x1f]
    %v126 = vld [vmem:[%s1 + $0x10] sm:$0x1f]
    %v127 = vld [vmem:[%s1 + $0x18] sm:$0x1f]
    %v128 = vld [vmem:[%s3] sm:$0xf]
    %v130 = vlaneseq
    %v131 = vshrl.u32 %v130, 7
    %v132 = vsub.s32 0, %v131
    %v133 = vrot.slane %v128, %v132
    %v134 = vlaneseq
    %v135 = vshrl.u32 %v134, 7
    %v136 = vsub.s32 1, %v135
    %v137 = vrot.slane %v128, %v136
    %v138 = vlaneseq
    %v139 = vshrl.u32 %v138, 7
    %v140 = vsub.s32 2, %v139
    %v141 = vrot.slane %v128, %v140
    %v142 = vlaneseq
    %v143 = vshrl.u32 %v142, 7
    %v144 = vsub.s32 3, %v143
    %v145 = vrot.slane %v128, %v144
    %vm150 = vcmask 39936
    %v152 = vsel %vm150, %v116, 0
    %v155 = vsel %vm150, %v117, 0
    %v158 = vsel %vm150, %v118, 0
    %v161 = vsel %vm150, %v119, 0
    %v164 = vsel %vm150, %v120, 0
    %v167 = vsel %vm150, %v121, 0
    %v170 = vsel %vm150, %v122, 0
    %v173 = vsel %vm150, %v123, 0
    %vm175 = vcmask 1044480
    %v177 = vsel %vm175, %v124, 0
    %v180 = vsel %vm175, %v125, 0
    %v183 = vsel %vm175, %v126, 0
    %v186 = vsel %vm175, %v127, 0
    %188 = vmatprep.subr.mxu0 0.0
    %189 = vmatpush1.msra.mxu0 0.0
    %190 = vmatprep.subr.mxu0 0.0
    %191 = vmatpush1.msra.mxu0 0.0
    %192 = vmatprep.subr.mxu0 0.0
    %193 = vmatpush1.msra.mxu0 0.0
    %194 = vmatprep.subr.mxu0 0.0
    %195 = vmatpush1.msra.mxu0 0.0
    %196 = vmatprep.subr.mxu0 0.0
    %197 = vmatpush1.msra.mxu0 0.0
    %198 = vmatprep.subr.mxu0 0.0
    %199 = vmatpush1.msra.mxu0 0.0
    %200 = vmatprep.subr.mxu0 0.0
    %201 = vmatpush1.msra.mxu0 0.0
    %202 = vmatprep.subr.mxu0 0.0
    %203 = vmatpush1.msra.mxu0 0.0
    %204 = vmatprep.subr.mxu0 0.0
    %205 = vmatpush1.msra.mxu0 0.0
    %206 = vmatprep.subr.mxu0 0.0
    %207 = vmatpush1.msra.mxu0 0.0
    %208 = vmatprep.subr.mxu0 0.0
    %209 = vmatpush1.msra.mxu0 0.0
    %210 = vmatprep.subr.mxu0 0.0
    %211 = vmatpush1.msra.mxu0 0.0
    %212 = vmatprep.subr.mxu0 0.0
    %213 = vmatpush1.msra.mxu0 0.0
    %214 = vmatprep.subr.mxu0 0.0
    %215 = vmatpush1.msra.mxu0 0.0
    %216 = vmatprep.subr.mxu0 0.0
    %217 = vmatpush1.msra.mxu0 0.0
    %218 = vmatprep.subr.mxu0 %v180
    %219 = vmatpush1.msra.mxu0 %v177
    %220 = vmatprep.subr.mxu0 0.0
    %221 = vmatpush2.msra.mxu0 0.0
    %222 = vmatprep.subr.mxu0 0.0
    %223 = vmatpush2.msra.mxu0 0.0
    %224 = vmatprep.subr.mxu0 0.0
    %225 = vmatpush2.msra.mxu0 0.0
    %226 = vmatprep.subr.mxu0 0.0
    %227 = vmatpush2.msra.mxu0 0.0
    %228 = vmatprep.subr.mxu0 0.0
    %229 = vmatpush2.msra.mxu0 0.0
    %230 = vmatprep.subr.mxu0 0.0
    %231 = vmatpush2.msra.mxu0 0.0
    %232 = vmatprep.subr.mxu0 0.0
    %233 = vmatpush2.msra.mxu0 0.0
    %234 = vmatprep.subr.mxu0 0.0
    %235 = vmatpush2.msra.mxu0 0.0
    %236 = vmatprep.subr.mxu0 0.0
    %237 = vmatpush2.msra.mxu0 0.0
    %238 = vmatprep.subr.mxu0 0.0
    %239 = vmatpush2.msra.mxu0 0.0
    %240 = vmatprep.subr.mxu0 0.0
    %241 = vmatpush2.msra.mxu0 0.0
    %242 = vmatprep.subr.mxu0 0.0
    %243 = vmatpush2.msra.mxu0 0.0
    %244 = vmatprep.subr.mxu0 0.0
    %245 = vmatpush2.msra.mxu0 0.0
    %246 = vmatprep.subr.mxu0 0.0
    %247 = vmatpush2.msra.mxu0 0.0
    %248 = vmatprep.subr.mxu0 0.0
    %249 = vmatpush2.msra.mxu0 0.0
    %250 = vmatprep.subr.mxu0 0.0
    %251 = vmatpush2.msra.mxu0 0.0
    %252 = vmatprep.mubr.f32.mxu0 0.0
    %253 = vmatmul.mubr.f32.gmra.mxu0 %v152
    %v254 = vpop.f32.mrf.mxu0
    %v255 = vadd.f32 %v133, %v254
    %v256 = vpop.f32.mrf.mxu0
    %v257 = vadd.f32 %v137, %v256
    %258 = vmatprep.mubr.f32.mxu0 0.0
    %259 = vmatmul.mubr.f32.gmra.mxu0 %v155
    %v260 = vpop.f32.mrf.mxu0
    %v261 = vadd.f32 %v133, %v260
    %v262 = vpop.f32.mrf.mxu0
    %v263 = vadd.f32 %v137, %v262
    %264 = vmatprep.mubr.f32.mxu0 0.0
    %265 = vmatmul.mubr.f32.gmra.mxu0 %v158
    %v266 = vpop.f32.mrf.mxu0
    %v267 = vadd.f32 %v133, %v266
    %v268 = vpop.f32.mrf.mxu0
    %v269 = vadd.f32 %v137, %v268
    %270 = vmatprep.mubr.f32.mxu0 0.0
    %271 = vmatmul.mubr.f32.gmra.mxu0 %v161
    %v272 = vpop.f32.mrf.mxu0
    %v273 = vadd.f32 %v133, %v272
    %v274 = vpop.f32.mrf.mxu0
    %v275 = vadd.f32 %v137, %v274
    %276 = vmatprep.mubr.f32.mxu0 0.0
    %277 = vmatmul.mubr.f32.gmra.mxu0 %v164
    %v278 = vpop.f32.mrf.mxu0
    %v279 = vadd.f32 %v133, %v278
    %v280 = vpop.f32.mrf.mxu0
    %v281 = vadd.f32 %v137, %v280
    %282 = vmatprep.mubr.f32.mxu0 0.0
    %283 = vmatmul.mubr.f32.gmra.mxu0 %v167
    %v284 = vpop.f32.mrf.mxu0
    %v285 = vadd.f32 %v133, %v284
    %v286 = vpop.f32.mrf.mxu0
    %v287 = vadd.f32 %v137, %v286
    %288 = vmatprep.mubr.f32.mxu0 0.0
    %289 = vmatmul.mubr.f32.gmra.mxu0 %v170
    %v290 = vpop.f32.mrf.mxu0
    %v291 = vadd.f32 %v133, %v290
    %v292 = vpop.f32.mrf.mxu0
    %v293 = vadd.f32 %v137, %v292
    %294 = vmatprep.mubr.f32.mxu0 0.0
    %295 = vmatmul.mubr.f32.gmra.mxu0 %v173
    %v296 = vpop.f32.mrf.mxu0
    %v297 = vadd.f32 %v133, %v296
    %v298 = vpop.f32.mrf.mxu0
    %v299 = vadd.f32 %v137, %v298
    %300 = vdwg.mxu0
    %301 = vmatprep.subr.mxu0 0.0
    %302 = vmatpush1.msra.mxu0 0.0
    %303 = vmatprep.subr.mxu0 0.0
    %304 = vmatpush1.msra.mxu0 0.0
    %305 = vmatprep.subr.mxu0 0.0
    %306 = vmatpush1.msra.mxu0 0.0
    %307 = vmatprep.subr.mxu0 0.0
    %308 = vmatpush1.msra.mxu0 0.0
    %309 = vmatprep.subr.mxu0 0.0
    %310 = vmatpush1.msra.mxu0 0.0
    %311 = vmatprep.subr.mxu0 0.0
    %312 = vmatpush1.msra.mxu0 0.0
    %313 = vmatprep.subr.mxu0 0.0
    %314 = vmatpush1.msra.mxu0 0.0
    %315 = vmatprep.subr.mxu0 0.0
    %316 = vmatpush1.msra.mxu0 0.0
    %317 = vmatprep.subr.mxu0 0.0
    %318 = vmatpush1.msra.mxu0 0.0
    %319 = vmatprep.subr.mxu0 0.0
    %320 = vmatpush1.msra.mxu0 0.0
    %321 = vmatprep.subr.mxu0 0.0
    %322 = vmatpush1.msra.mxu0 0.0
    %323 = vmatprep.subr.mxu0 0.0
    %324 = vmatpush1.msra.mxu0 0.0
    %325 = vmatprep.subr.mxu0 0.0
    %326 = vmatpush1.msra.mxu0 0.0
    %327 = vmatprep.subr.mxu0 0.0
    %328 = vmatpush1.msra.mxu0 0.0
    %329 = vmatprep.subr.mxu0 0.0
    %330 = vmatpush1.msra.mxu0 0.0
    %331 = vmatprep.subr.mxu0 %v186
    %332 = vmatpush1.msra.mxu0 %v183
    %333 = vmatprep.subr.mxu0 0.0
    %334 = vmatpush2.msra.mxu0 0.0
    %335 = vmatprep.subr.mxu0 0.0
    %336 = vmatpush2.msra.mxu0 0.0
    %337 = vmatprep.subr.mxu0 0.0
    %338 = vmatpush2.msra.mxu0 0.0
    %339 = vmatprep.subr.mxu0 0.0
    %340 = vmatpush2.msra.mxu0 0.0
    %341 = vmatprep.subr.mxu0 0.0
    %342 = vmatpush2.msra.mxu0 0.0
    %343 = vmatprep.subr.mxu0 0.0
    %344 = vmatpush2.msra.mxu0 0.0
    %345 = vmatprep.subr.mxu0 0.0
    %346 = vmatpush2.msra.mxu0 0.0
    %347 = vmatprep.subr.mxu0 0.0
    %348 = vmatpush2.msra.mxu0 0.0
    %349 = vmatprep.subr.mxu0 0.0
    %350 = vmatpush2.msra.mxu0 0.0
    %351 = vmatprep.subr.mxu0 0.0
    %352 = vmatpush2.msra.mxu0 0.0
    %353 = vmatprep.subr.mxu0 0.0
    %354 = vmatpush2.msra.mxu0 0.0
    %355 = vmatprep.subr.mxu0 0.0
    %356 = vmatpush2.msra.mxu0 0.0
    %357 = vmatprep.subr.mxu0 0.0
    %358 = vmatpush2.msra.mxu0 0.0
    %359 = vmatprep.subr.mxu0 0.0
    %360 = vmatpush2.msra.mxu0 0.0
    %361 = vmatprep.subr.mxu0 0.0
    %362 = vmatpush2.msra.mxu0 0.0
    %363 = vmatprep.subr.mxu0 0.0
    %364 = vmatpush2.msra.mxu0 0.0
    %365 = vmatprep.mubr.f32.mxu0 0.0
    %366 = vmatmul.mubr.f32.gmra.mxu0 %v152
    %v367 = vpop.f32.mrf.mxu0
    %v368 = vadd.f32 %v141, %v367
    %v369 = vpop.f32.mrf.mxu0
    %v370 = vadd.f32 %v145, %v369
    %371 = vmatprep.mubr.f32.mxu0 0.0
    %372 = vmatmul.mubr.f32.gmra.mxu0 %v155
    %v373 = vpop.f32.mrf.mxu0
    %v374 = vadd.f32 %v141, %v373
    %v375 = vpop.f32.mrf.mxu0
    %v376 = vadd.f32 %v145, %v375
    %377 = vmatprep.mubr.f32.mxu0 0.0
    %378 = vmatmul.mubr.f32.gmra.mxu0 %v158
    %v379 = vpop.f32.mrf.mxu0
    %v380 = vadd.f32 %v141, %v379
    %v381 = vpop.f32.mrf.mxu0
    %v382 = vadd.f32 %v145, %v381
    %383 = vmatprep.mubr.f32.mxu0 0.0
    %384 = vmatmul.mubr.f32.gmra.mxu0 %v161
    %v385 = vpop.f32.mrf.mxu0
    %v386 = vadd.f32 %v141, %v385
    %v387 = vpop.f32.mrf.mxu0
    %v388 = vadd.f32 %v145, %v387
    %389 = vmatprep.mubr.f32.mxu0 0.0
    %390 = vmatmul.mubr.f32.gmra.mxu0 %v164
    %v391 = vpop.f32.mrf.mxu0
    %v392 = vadd.f32 %v141, %v391
    %v393 = vpop.f32.mrf.mxu0
    %v394 = vadd.f32 %v145, %v393
    %395 = vmatprep.mubr.f32.mxu0 0.0
    %396 = vmatmul.mubr.f32.gmra.mxu0 %v167
    %v397 = vpop.f32.mrf.mxu0
    %v398 = vadd.f32 %v141, %v397
    %v399 = vpop.f32.mrf.mxu0
    %v400 = vadd.f32 %v145, %v399
    %401 = vmatprep.mubr.f32.mxu0 0.0
    %402 = vmatmul.mubr.f32.gmra.mxu0 %v170
    %v403 = vpop.f32.mrf.mxu0
    %v404 = vadd.f32 %v141, %v403
    %v405 = vpop.f32.mrf.mxu0
    %v406 = vadd.f32 %v145, %v405
    %407 = vmatprep.mubr.f32.mxu0 0.0
    %408 = vmatmul.mubr.f32.gmra.mxu0 %v173
    %v409 = vpop.f32.mrf.mxu0
    %v410 = vadd.f32 %v141, %v409
    %v411 = vpop.f32.mrf.mxu0
    %v412 = vadd.f32 %v145, %v411
    %413 = vdwg.mxu0
    %414 = vmatprep.subr.mxu0 %v113
    %415 = vmatpush1.msra.mxu0 %v112
    %416 = vmatprep.subr.mxu0 %v109
    %417 = vmatpush1.msra.mxu0 %v108
    %418 = vmatprep.subr.mxu0 %v105
    %419 = vmatpush1.msra.mxu0 %v104
    %420 = vmatprep.subr.mxu0 %v101
    %421 = vmatpush1.msra.mxu0 %v100
    %422 = vmatprep.subr.mxu0 %v97
    %423 = vmatpush1.msra.mxu0 %v96
    %424 = vmatprep.subr.mxu0 %v93
    %425 = vmatpush1.msra.mxu0 %v92
    %426 = vmatprep.subr.mxu0 %v89
    %427 = vmatpush1.msra.mxu0 %v88
    %428 = vmatprep.subr.mxu0 %v85
    %429 = vmatpush1.msra.mxu0 %v84
    %430 = vmatprep.subr.mxu0 %v81
    %431 = vmatpush1.msra.mxu0 %v80
    %432 = vmatprep.subr.mxu0 %v77
    %433 = vmatpush1.msra.mxu0 %v76
    %434 = vmatprep.subr.mxu0 %v73
    %435 = vmatpush1.msra.mxu0 %v72
    %436 = vmatprep.subr.mxu0 %v69
    %437 = vmatpush1.msra.mxu0 %v68
    %438 = vmatprep.subr.mxu0 %v65
    %439 = vmatpush1.msra.mxu0 %v64
    %440 = vmatprep.subr.mxu0 %v61
    %441 = vmatpush1.msra.mxu0 %v60
    %442 = vmatprep.subr.mxu0 %v57
    %443 = vmatpush1.msra.mxu0 %v56
    %444 = vmatprep.subr.mxu0 %v53
    %445 = vmatpush1.msra.mxu0 %v52
    %446 = vmatprep.subr.mxu0 0.0
    %447 = vmatpush2.msra.mxu0 0.0
    %448 = vmatprep.subr.mxu0 0.0
    %449 = vmatpush2.msra.mxu0 0.0
    %450 = vmatprep.subr.mxu0 0.0
    %451 = vmatpush2.msra.mxu0 0.0
    %452 = vmatprep.subr.mxu0 0.0
    %453 = vmatpush2.msra.mxu0 0.0
    %454 = vmatprep.subr.mxu0 0.0
    %455 = vmatpush2.msra.mxu0 0.0
    %456 = vmatprep.subr.mxu0 0.0
    %457 = vmatpush2.msra.mxu0 0.0
    %458 = vmatprep.subr.mxu0 0.0
    %459 = vmatpush2.msra.mxu0 0.0
    %460 = vmatprep.subr.mxu0 0.0
    %461 = vmatpush2.msra.mxu0 0.0
    %462 = vmatprep.subr.mxu0 0.0
    %463 = vmatpush2.msra.mxu0 0.0
    %464 = vmatprep.subr.mxu0 0.0
    %465 = vmatpush2.msra.mxu0 0.0
    %466 = vmatprep.subr.mxu0 0.0
    %467 = vmatpush2.msra.mxu0 0.0
    %468 = vmatprep.subr.mxu0 0.0
    %469 = vmatpush2.msra.mxu0 0.0
    %470 = vmatprep.subr.mxu0 0.0
    %471 = vmatpush2.msra.mxu0 0.0
    %472 = vmatprep.subr.mxu0 0.0
    %473 = vmatpush2.msra.mxu0 0.0
    %474 = vmatprep.subr.mxu0 0.0
    %475 = vmatpush2.msra.mxu0 0.0
    %476 = vmatprep.subr.mxu0 0.0
    %477 = vmatpush2.msra.mxu0 0.0
    %478 = vmatprep.mubr.f32.mxu0 0.0
    %479 = vmatmul.mubr.f32.gmra.mxu0 0.0
    %v480 = vpop.f32.mrf.mxu0
    %v481 = vadd.f32 0.0, %v480
    %v482 = vpop.f32.mrf.mxu0
    %v483 = vadd.f32 0.0, %v482
    %484 = vdwg.mxu0
    %485 = vmatprep.subr.mxu0 %v115
    %486 = vmatpush1.msra.mxu0 %v114
    %487 = vmatprep.subr.mxu0 %v111
    %488 = vmatpush1.msra.mxu0 %v110
    %489 = vmatprep.subr.mxu0 %v107
    %490 = vmatpush1.msra.mxu0 %v106
    %491 = vmatprep.subr.mxu0 %v103
    %492 = vmatpush1.msra.mxu0 %v102
    %493 = vmatprep.subr.mxu0 %v99
    %494 = vmatpush1.msra.mxu0 %v98
    %495 = vmatprep.subr.mxu0 %v95
    %496 = vmatpush1.msra.mxu0 %v94
    %497 = vmatprep.subr.mxu0 %v91
    %498 = vmatpush1.msra.mxu0 %v90
    %499 = vmatprep.subr.mxu0 %v87
    %500 = vmatpush1.msra.mxu0 %v86
    %501 = vmatprep.subr.mxu0 %v83
    %502 = vmatpush1.msra.mxu0 %v82
    %503 = vmatprep.subr.mxu0 %v79
    %504 = vmatpush1.msra.mxu0 %v78
    %505 = vmatprep.subr.mxu0 %v75
    %506 = vmatpush1.msra.mxu0 %v74
    %507 = vmatprep.subr.mxu0 %v71
    %508 = vmatpush1.msra.mxu0 %v70
    %509 = vmatprep.subr.mxu0 %v67
    %510 = vmatpush1.msra.mxu0 %v66
    %511 = vmatprep.subr.mxu0 %v63
    %512 = vmatpush1.msra.mxu0 %v62
    %513 = vmatprep.subr.mxu0 %v59
    %514 = vmatpush1.msra.mxu0 %v58
    %515 = vmatprep.subr.mxu0 %v55
    %516 = vmatpush1.msra.mxu0 %v54
    %517 = vmatprep.subr.mxu0 0.0
    %518 = vmatpush2.msra.mxu0 0.0
    %519 = vmatprep.subr.mxu0 0.0
    %520 = vmatpush2.msra.mxu0 0.0
    %521 = vmatprep.subr.mxu0 0.0
    %522 = vmatpush2.msra.mxu0 0.0
    %523 = vmatprep.subr.mxu0 0.0
    %524 = vmatpush2.msra.mxu0 0.0
    %525 = vmatprep.subr.mxu0 0.0
    %526 = vmatpush2.msra.mxu0 0.0
    %527 = vmatprep.subr.mxu0 0.0
    %528 = vmatpush2.msra.mxu0 0.0
    %529 = vmatprep.subr.mxu0 0.0
    %530 = vmatpush2.msra.mxu0 0.0
    %531 = vmatprep.subr.mxu0 0.0
    %532 = vmatpush2.msra.mxu0 0.0
    %533 = vmatprep.subr.mxu0 0.0
    %534 = vmatpush2.msra.mxu0 0.0
    %535 = vmatprep.subr.mxu0 0.0
    %536 = vmatpush2.msra.mxu0 0.0
    %537 = vmatprep.subr.mxu0 0.0
    %538 = vmatpush2.msra.mxu0 0.0
    %539 = vmatprep.subr.mxu0 0.0
    %540 = vmatpush2.msra.mxu0 0.0
    %541 = vmatprep.subr.mxu0 0.0
    %542 = vmatpush2.msra.mxu0 0.0
    %543 = vmatprep.subr.mxu0 0.0
    %544 = vmatpush2.msra.mxu0 0.0
    %545 = vmatprep.subr.mxu0 0.0
    %546 = vmatpush2.msra.mxu0 0.0
    %547 = vmatprep.subr.mxu0 0.0
    %548 = vmatpush2.msra.mxu0 0.0
    %549 = vmatprep.mubr.f32.mxu0 0.0
    %550 = vmatmul.mubr.f32.gmra.mxu0 0.0
    %v551 = vpop.f32.mrf.mxu0
    %v552 = vadd.f32 0.0, %v551
    %v553 = vpop.f32.mrf.mxu0
    %v554 = vadd.f32 0.0, %v553
    %555 = vdwg.mxu0
    %v556 = vadd.f32 %v255, %v481
    %v557 = vadd.f32 %v257, %v483
    %v558 = vadd.f32 %v368, %v552
    %v559 = vadd.f32 %v370, %v554
    %v560 = vxor.u32 %v556, 2147483648
    %v561 = vmul.f32 %v560, 1.442695
    %v562 = vpow.pop %v561
    %v563 = vadd.f32 %v562, 1.0
    %v564 = vrcp.pop %v563
    %v565 = vmul.f32 1.0, %v564
    %v566 = vxor.u32 %v557, 2147483648
    %v567 = vmul.f32 %v566, 1.442695
    %v568 = vpow.pop %v567
    %v569 = vadd.f32 %v568, 1.0
    %v570 = vrcp.pop %v569
    %v571 = vmul.f32 1.0, %v570
    %v572 = vtanh.pop %v558
    %v573 = vxor.u32 %v559, 2147483648
    %v574 = vmul.f32 %v573, 1.442695
    %v575 = vpow.pop %v574
    %v576 = vadd.f32 %v575, 1.0
    %v577 = vrcp.pop %v576
    %v578 = vmul.f32 1.0, %v577
    %v579 = vmul.f32 %v571, 0.0
    %v580 = vmul.f32 %v565, %v572
    %v581 = vadd.f32 %v579, %v580
    %v582 = vtanh.pop %v581
    %v583 = vmul.f32 %v578, %v582
    %584 = vmatprep.subr.mxu0 %v113
    %585 = vmatpush1.msra.mxu0 %v112
    %586 = vmatprep.subr.mxu0 %v109
    %587 = vmatpush1.msra.mxu0 %v108
    %588 = vmatprep.subr.mxu0 %v105
    %589 = vmatpush1.msra.mxu0 %v104
    %590 = vmatprep.subr.mxu0 %v101
    %591 = vmatpush1.msra.mxu0 %v100
    %592 = vmatprep.subr.mxu0 %v97
    %593 = vmatpush1.msra.mxu0 %v96
    %594 = vmatprep.subr.mxu0 %v93
    %595 = vmatpush1.msra.mxu0 %v92
    %596 = vmatprep.subr.mxu0 %v89
    %597 = vmatpush1.msra.mxu0 %v88
    %598 = vmatprep.subr.mxu0 %v85
    %599 = vmatpush1.msra.mxu0 %v84
    %600 = vmatprep.subr.mxu0 %v81
    %601 = vmatpush1.msra.mxu0 %v80
    %602 = vmatprep.subr.mxu0 %v77
    %603 = vmatpush1.msra.mxu0 %v76
    %604 = vmatprep.subr.mxu0 %v73
    %605 = vmatpush1.msra.mxu0 %v72
    %606 = vmatprep.subr.mxu0 %v69
    %607 = vmatpush1.msra.mxu0 %v68
    %608 = vmatprep.subr.mxu0 %v65
    %609 = vmatpush1.msra.mxu0 %v64
    %610 = vmatprep.subr.mxu0 %v61
    %611 = vmatpush1.msra.mxu0 %v60
    %612 = vmatprep.subr.mxu0 %v57
    %613 = vmatpush1.msra.mxu0 %v56
    %614 = vmatprep.subr.mxu0 %v53
    %615 = vmatpush1.msra.mxu0 %v52
    %616 = vmatprep.subr.mxu0 0.0
    %617 = vmatpush2.msra.mxu0 0.0
    %618 = vmatprep.subr.mxu0 0.0
    %619 = vmatpush2.msra.mxu0 0.0
    %620 = vmatprep.subr.mxu0 0.0
    %621 = vmatpush2.msra.mxu0 0.0
    %622 = vmatprep.subr.mxu0 0.0
    %623 = vmatpush2.msra.mxu0 0.0
    %624 = vmatprep.subr.mxu0 0.0
    %625 = vmatpush2.msra.mxu0 0.0
    %626 = vmatprep.subr.mxu0 0.0
    %627 = vmatpush2.msra.mxu0 0.0
    %628 = vmatprep.subr.mxu0 0.0
    %629 = vmatpush2.msra.mxu0 0.0
    %630 = vmatprep.subr.mxu0 0.0
    %631 = vmatpush2.msra.mxu0 0.0
    %632 = vmatprep.subr.mxu0 0.0
    %633 = vmatpush2.msra.mxu0 0.0
    %634 = vmatprep.subr.mxu0 0.0
    %635 = vmatpush2.msra.mxu0 0.0
    %636 = vmatprep.subr.mxu0 0.0
    %637 = vmatpush2.msra.mxu0 0.0
    %638 = vmatprep.subr.mxu0 0.0
    %639 = vmatpush2.msra.mxu0 0.0
    %640 = vmatprep.subr.mxu0 0.0
    %641 = vmatpush2.msra.mxu0 0.0
    %642 = vmatprep.subr.mxu0 0.0
    %643 = vmatpush2.msra.mxu0 0.0
    %644 = vmatprep.subr.mxu0 0.0
    %645 = vmatpush2.msra.mxu0 0.0
    %646 = vmatprep.subr.mxu0 0.0
    %647 = vmatpush2.msra.mxu0 0.0
    %648 = vmatprep.mubr.f32.mxu0 0.0
    %649 = vmatmul.mubr.f32.gmra.mxu0 %v583
    %v650 = vpop.f32.mrf.mxu0
    %v651 = vadd.f32 0.0, %v650
    %v652 = vpop.f32.mrf.mxu0
    %v653 = vadd.f32 0.0, %v652
    %654 = vdwg.mxu0
    %655 = vmatprep.subr.mxu0 %v115
    %656 = vmatpush1.msra.mxu0 %v114
    %657 = vmatprep.subr.mxu0 %v111
    %658 = vmatpush1.msra.mxu0 %v110
    %659 = vmatprep.subr.mxu0 %v107
    %660 = vmatpush1.msra.mxu0 %v106
    %661 = vmatprep.subr.mxu0 %v103
    %662 = vmatpush1.msra.mxu0 %v102
    %663 = vmatprep.subr.mxu0 %v99
    %664 = vmatpush1.msra.mxu0 %v98
    %665 = vmatprep.subr.mxu0 %v95
    %666 = vmatpush1.msra.mxu0 %v94
    %667 = vmatprep.subr.mxu0 %v91
    %668 = vmatpush1.msra.mxu0 %v90
    %669 = vmatprep.subr.mxu0 %v87
    %670 = vmatpush1.msra.mxu0 %v86
    %671 = vmatprep.subr.mxu0 %v83
    %672 = vmatpush1.msra.mxu0 %v82
    %673 = vmatprep.subr.mxu0 %v79
    %674 = vmatpush1.msra.mxu0 %v78
    %675 = vmatprep.subr.mxu0 %v75
    %676 = vmatpush1.msra.mxu0 %v74
    %677 = vmatprep.subr.mxu0 %v71
    %678 = vmatpush1.msra.mxu0 %v70
    %679 = vmatprep.subr.mxu0 %v67
    %680 = vmatpush1.msra.mxu0 %v66
    %681 = vmatprep.subr.mxu0 %v63
    %682 = vmatpush1.msra.mxu0 %v62
    %683 = vmatprep.subr.mxu0 %v59
    %684 = vmatpush1.msra.mxu0 %v58
    %685 = vmatprep.subr.mxu0 %v55
    %686 = vmatpush1.msra.mxu0 %v54
    %687 = vmatprep.subr.mxu0 0.0
    %688 = vmatpush2.msra.mxu0 0.0
    %689 = vmatprep.subr.mxu0 0.0
    %690 = vmatpush2.msra.mxu0 0.0
    %691 = vmatprep.subr.mxu0 0.0
    %692 = vmatpush2.msra.mxu0 0.0
    %693 = vmatprep.subr.mxu0 0.0
    %694 = vmatpush2.msra.mxu0 0.0
    %695 = vmatprep.subr.mxu0 0.0
    %696 = vmatpush2.msra.mxu0 0.0
    %697 = vmatprep.subr.mxu0 0.0
    %698 = vmatpush2.msra.mxu0 0.0
    %699 = vmatprep.subr.mxu0 0.0
    %700 = vmatpush2.msra.mxu0 0.0
    %701 = vmatprep.subr.mxu0 0.0
    %702 = vmatpush2.msra.mxu0 0.0
    %703 = vmatprep.subr.mxu0 0.0
    %704 = vmatpush2.msra.mxu0 0.0
    %705 = vmatprep.subr.mxu0 0.0
    %706 = vmatpush2.msra.mxu0 0.0
    %707 = vmatprep.subr.mxu0 0.0
    %708 = vmatpush2.msra.mxu0 0.0
    %709 = vmatprep.subr.mxu0 0.0
    %710 = vmatpush2.msra.mxu0 0.0
    %711 = vmatprep.subr.mxu0 0.0
    %712 = vmatpush2.msra.mxu0 0.0
    %713 = vmatprep.subr.mxu0 0.0
    %714 = vmatpush2.msra.mxu0 0.0
    %715 = vmatprep.subr.mxu0 0.0
    %716 = vmatpush2.msra.mxu0 0.0
    %717 = vmatprep.subr.mxu0 0.0
    %718 = vmatpush2.msra.mxu0 0.0
    %719 = vmatprep.mubr.f32.mxu0 0.0
    %720 = vmatmul.mubr.f32.gmra.mxu0 %v583
    %v721 = vpop.f32.mrf.mxu0
    %v722 = vadd.f32 0.0, %v721
    %v723 = vpop.f32.mrf.mxu0
    %v724 = vadd.f32 0.0, %v723
    %725 = vdwg.mxu0
    %v726 = vadd.f32 %v261, %v651
    %v727 = vadd.f32 %v263, %v653
    %v728 = vadd.f32 %v374, %v722
    %v729 = vadd.f32 %v376, %v724
    %v730 = vxor.u32 %v726, 2147483648
    %v731 = vmul.f32 %v730, 1.442695
    %v732 = vpow.pop %v731
    %v733 = vadd.f32 %v732, 1.0
    %v734 = vrcp.pop %v733
    %v735 = vmul.f32 1.0, %v734
    %v736 = vxor.u32 %v727, 2147483648
    %v737 = vmul.f32 %v736, 1.442695
    %v738 = vpow.pop %v737
    %v739 = vadd.f32 %v738, 1.0
    %v740 = vrcp.pop %v739
    %v741 = vmul.f32 1.0, %v740
    %v742 = vtanh.pop %v728
    %v743 = vxor.u32 %v729, 2147483648
    %v744 = vmul.f32 %v743, 1.442695
    %v745 = vpow.pop %v744
    %v746 = vadd.f32 %v745, 1.0
    %v747 = vrcp.pop %v746
    %v748 = vmul.f32 1.0, %v747
    %v749 = vmul.f32 %v741, %v581
    %v750 = vmul.f32 %v735, %v742
    %v751 = vadd.f32 %v749, %v750
    %v752 = vtanh.pop %v751
    %v753 = vmul.f32 %v748, %v752
    %754 = vmatprep.subr.mxu0 %v113
    %755 = vmatpush1.msra.mxu0 %v112
    %756 = vmatprep.subr.mxu0 %v109
    %757 = vmatpush1.msra.mxu0 %v108
    %758 = vmatprep.subr.mxu0 %v105
    %759 = vmatpush1.msra.mxu0 %v104
    %760 = vmatprep.subr.mxu0 %v101
    %761 = vmatpush1.msra.mxu0 %v100
    %762 = vmatprep.subr.mxu0 %v97
    %763 = vmatpush1.msra.mxu0 %v96
    %764 = vmatprep.subr.mxu0 %v93
    %765 = vmatpush1.msra.mxu0 %v92
    %766 = vmatprep.subr.mxu0 %v89
    %767 = vmatpush1.msra.mxu0 %v88
    %768 = vmatprep.subr.mxu0 %v85
    %769 = vmatpush1.msra.mxu0 %v84
    %770 = vmatprep.subr.mxu0 %v81
    %771 = vmatpush1.msra.mxu0 %v80
    %772 = vmatprep.subr.mxu0 %v77
    %773 = vmatpush1.msra.mxu0 %v76
    %774 = vmatprep.subr.mxu0 %v73
    %775 = vmatpush1.msra.mxu0 %v72
    %776 = vmatprep.subr.mxu0 %v69
    %777 = vmatpush1.msra.mxu0 %v68
    %778 = vmatprep.subr.mxu0 %v65
    %779 = vmatpush1.msra.mxu0 %v64
    %780 = vmatprep.subr.mxu0 %v61
    %781 = vmatpush1.msra.mxu0 %v60
    %782 = vmatprep.subr.mxu0 %v57
    %783 = vmatpush1.msra.mxu0 %v56
    %784 = vmatprep.subr.mxu0 %v53
    %785 = vmatpush1.msra.mxu0 %v52
    %786 = vmatprep.subr.mxu0 0.0
    %787 = vmatpush2.msra.mxu0 0.0
    %788 = vmatprep.subr.mxu0 0.0
    %789 = vmatpush2.msra.mxu0 0.0
    %790 = vmatprep.subr.mxu0 0.0
    %791 = vmatpush2.msra.mxu0 0.0
    %792 = vmatprep.subr.mxu0 0.0
    %793 = vmatpush2.msra.mxu0 0.0
    %794 = vmatprep.subr.mxu0 0.0
    %795 = vmatpush2.msra.mxu0 0.0
    %796 = vmatprep.subr.mxu0 0.0
    %797 = vmatpush2.msra.mxu0 0.0
    %798 = vmatprep.subr.mxu0 0.0
    %799 = vmatpush2.msra.mxu0 0.0
    %800 = vmatprep.subr.mxu0 0.0
    %801 = vmatpush2.msra.mxu0 0.0
    %802 = vmatprep.subr.mxu0 0.0
    %803 = vmatpush2.msra.mxu0 0.0
    %804 = vmatprep.subr.mxu0 0.0
    %805 = vmatpush2.msra.mxu0 0.0
    %806 = vmatprep.subr.mxu0 0.0
    %807 = vmatpush2.msra.mxu0 0.0
    %808 = vmatprep.subr.mxu0 0.0
    %809 = vmatpush2.msra.mxu0 0.0
    %810 = vmatprep.subr.mxu0 0.0
    %811 = vmatpush2.msra.mxu0 0.0
    %812 = vmatprep.subr.mxu0 0.0
    %813 = vmatpush2.msra.mxu0 0.0
    %814 = vmatprep.subr.mxu0 0.0
    %815 = vmatpush2.msra.mxu0 0.0
    %816 = vmatprep.subr.mxu0 0.0
    %817 = vmatpush2.msra.mxu0 0.0
    %818 = vmatprep.mubr.f32.mxu0 0.0
    %819 = vmatmul.mubr.f32.gmra.mxu0 %v753
    %v820 = vpop.f32.mrf.mxu0
    %v821 = vadd.f32 0.0, %v820
    %v822 = vpop.f32.mrf.mxu0
    %v823 = vadd.f32 0.0, %v822
    %824 = vdwg.mxu0
    %825 = vmatprep.subr.mxu0 %v115
    %826 = vmatpush1.msra.mxu0 %v114
    %827 = vmatprep.subr.mxu0 %v111
    %828 = vmatpush1.msra.mxu0 %v110
    %829 = vmatprep.subr.mxu0 %v107
    %830 = vmatpush1.msra.mxu0 %v106
    %831 = vmatprep.subr.mxu0 %v103
    %832 = vmatpush1.msra.mxu0 %v102
    %833 = vmatprep.subr.mxu0 %v99
    %834 = vmatpush1.msra.mxu0 %v98
    %835 = vmatprep.subr.mxu0 %v95
    %836 = vmatpush1.msra.mxu0 %v94
    %837 = vmatprep.subr.mxu0 %v91
    %838 = vmatpush1.msra.mxu0 %v90
    %839 = vmatprep.subr.mxu0 %v87
    %840 = vmatpush1.msra.mxu0 %v86
    %841 = vmatprep.subr.mxu0 %v83
    %842 = vmatpush1.msra.mxu0 %v82
    %843 = vmatprep.subr.mxu0 %v79
    %844 = vmatpush1.msra.mxu0 %v78
    %845 = vmatprep.subr.mxu0 %v75
    %846 = vmatpush1.msra.mxu0 %v74
    %847 = vmatprep.subr.mxu0 %v71
    %848 = vmatpush1.msra.mxu0 %v70
    %849 = vmatprep.subr.mxu0 %v67
    %850 = vmatpush1.msra.mxu0 %v66
    %851 = vmatprep.subr.mxu0 %v63
    %852 = vmatpush1.msra.mxu0 %v62
    %853 = vmatprep.subr.mxu0 %v59
    %854 = vmatpush1.msra.mxu0 %v58
    %855 = vmatprep.subr.mxu0 %v55
    %856 = vmatpush1.msra.mxu0 %v54
    %857 = vmatprep.subr.mxu0 0.0
    %858 = vmatpush2.msra.mxu0 0.0
    %859 = vmatprep.subr.mxu0 0.0
    %860 = vmatpush2.msra.mxu0 0.0
    %861 = vmatprep.subr.mxu0 0.0
    %862 = vmatpush2.msra.mxu0 0.0
    %863 = vmatprep.subr.mxu0 0.0
    %864 = vmatpush2.msra.mxu0 0.0
    %865 = vmatprep.subr.mxu0 0.0
    %866 = vmatpush2.msra.mxu0 0.0
    %867 = vmatprep.subr.mxu0 0.0
    %868 = vmatpush2.msra.mxu0 0.0
    %869 = vmatprep.subr.mxu0 0.0
    %870 = vmatpush2.msra.mxu0 0.0
    %871 = vmatprep.subr.mxu0 0.0
    %872 = vmatpush2.msra.mxu0 0.0
    %873 = vmatprep.subr.mxu0 0.0
    %874 = vmatpush2.msra.mxu0 0.0
    %875 = vmatprep.subr.mxu0 0.0
    %876 = vmatpush2.msra.mxu0 0.0
    %877 = vmatprep.subr.mxu0 0.0
    %878 = vmatpush2.msra.mxu0 0.0
    %879 = vmatprep.subr.mxu0 0.0
    %880 = vmatpush2.msra.mxu0 0.0
    %881 = vmatprep.subr.mxu0 0.0
    %882 = vmatpush2.msra.mxu0 0.0
    %883 = vmatprep.subr.mxu0 0.0
    %884 = vmatpush2.msra.mxu0 0.0
    %885 = vmatprep.subr.mxu0 0.0
    %886 = vmatpush2.msra.mxu0 0.0
    %887 = vmatprep.subr.mxu0 0.0
    %888 = vmatpush2.msra.mxu0 0.0
    %889 = vmatprep.mubr.f32.mxu0 0.0
    %890 = vmatmul.mubr.f32.gmra.mxu0 %v753
    %v891 = vpop.f32.mrf.mxu0
    %v892 = vadd.f32 0.0, %v891
    %v893 = vpop.f32.mrf.mxu0
    %v894 = vadd.f32 0.0, %v893
    %895 = vdwg.mxu0
    %v896 = vadd.f32 %v267, %v821
    %v897 = vadd.f32 %v269, %v823
    %v898 = vadd.f32 %v380, %v892
    %v899 = vadd.f32 %v382, %v894
    %v900 = vxor.u32 %v896, 2147483648
    %v901 = vmul.f32 %v900, 1.442695
    %v902 = vpow.pop %v901
    %v903 = vadd.f32 %v902, 1.0
    %v904 = vrcp.pop %v903
    %v905 = vmul.f32 1.0, %v904
    %v906 = vxor.u32 %v897, 2147483648
    %v907 = vmul.f32 %v906, 1.442695
    %v908 = vpow.pop %v907
    %v909 = vadd.f32 %v908, 1.0
    %v910 = vrcp.pop %v909
    %v911 = vmul.f32 1.0, %v910
    %v912 = vtanh.pop %v898
    %v913 = vxor.u32 %v899, 2147483648
    %v914 = vmul.f32 %v913, 1.442695
    %v915 = vpow.pop %v914
    %v916 = vadd.f32 %v915, 1.0
    %v917 = vrcp.pop %v916
    %v918 = vmul.f32 1.0, %v917
    %v919 = vmul.f32 %v911, %v751
    %v920 = vmul.f32 %v905, %v912
    %v921 = vadd.f32 %v919, %v920
    %v922 = vtanh.pop %v921
    %v923 = vmul.f32 %v918, %v922
    %924 = vmatprep.subr.mxu0 %v113
    %925 = vmatpush1.msra.mxu0 %v112
    %926 = vmatprep.subr.mxu0 %v109
    %927 = vmatpush1.msra.mxu0 %v108
    %928 = vmatprep.subr.mxu0 %v105
    %929 = vmatpush1.msra.mxu0 %v104
    %930 = vmatprep.subr.mxu0 %v101
    %931 = vmatpush1.msra.mxu0 %v100
    %932 = vmatprep.subr.mxu0 %v97
    %933 = vmatpush1.msra.mxu0 %v96
    %934 = vmatprep.subr.mxu0 %v93
    %935 = vmatpush1.msra.mxu0 %v92
    %936 = vmatprep.subr.mxu0 %v89
    %937 = vmatpush1.msra.mxu0 %v88
    %938 = vmatprep.subr.mxu0 %v85
    %939 = vmatpush1.msra.mxu0 %v84
    %940 = vmatprep.subr.mxu0 %v81
    %941 = vmatpush1.msra.mxu0 %v80
    %942 = vmatprep.subr.mxu0 %v77
    %943 = vmatpush1.msra.mxu0 %v76
    %944 = vmatprep.subr.mxu0 %v73
    %945 = vmatpush1.msra.mxu0 %v72
    %946 = vmatprep.subr.mxu0 %v69
    %947 = vmatpush1.msra.mxu0 %v68
    %948 = vmatprep.subr.mxu0 %v65
    %949 = vmatpush1.msra.mxu0 %v64
    %950 = vmatprep.subr.mxu0 %v61
    %951 = vmatpush1.msra.mxu0 %v60
    %952 = vmatprep.subr.mxu0 %v57
    %953 = vmatpush1.msra.mxu0 %v56
    %954 = vmatprep.subr.mxu0 %v53
    %955 = vmatpush1.msra.mxu0 %v52
    %956 = vmatprep.subr.mxu0 0.0
    %957 = vmatpush2.msra.mxu0 0.0
    %958 = vmatprep.subr.mxu0 0.0
    %959 = vmatpush2.msra.mxu0 0.0
    %960 = vmatprep.subr.mxu0 0.0
    %961 = vmatpush2.msra.mxu0 0.0
    %962 = vmatprep.subr.mxu0 0.0
    %963 = vmatpush2.msra.mxu0 0.0
    %964 = vmatprep.subr.mxu0 0.0
    %965 = vmatpush2.msra.mxu0 0.0
    %966 = vmatprep.subr.mxu0 0.0
    %967 = vmatpush2.msra.mxu0 0.0
    %968 = vmatprep.subr.mxu0 0.0
    %969 = vmatpush2.msra.mxu0 0.0
    %970 = vmatprep.subr.mxu0 0.0
    %971 = vmatpush2.msra.mxu0 0.0
    %972 = vmatprep.subr.mxu0 0.0
    %973 = vmatpush2.msra.mxu0 0.0
    %974 = vmatprep.subr.mxu0 0.0
    %975 = vmatpush2.msra.mxu0 0.0
    %976 = vmatprep.subr.mxu0 0.0
    %977 = vmatpush2.msra.mxu0 0.0
    %978 = vmatprep.subr.mxu0 0.0
    %979 = vmatpush2.msra.mxu0 0.0
    %980 = vmatprep.subr.mxu0 0.0
    %981 = vmatpush2.msra.mxu0 0.0
    %982 = vmatprep.subr.mxu0 0.0
    %983 = vmatpush2.msra.mxu0 0.0
    %984 = vmatprep.subr.mxu0 0.0
    %985 = vmatpush2.msra.mxu0 0.0
    %986 = vmatprep.subr.mxu0 0.0
    %987 = vmatpush2.msra.mxu0 0.0
    %988 = vmatprep.mubr.f32.mxu0 0.0
    %989 = vmatmul.mubr.f32.gmra.mxu0 %v923
    %v990 = vpop.f32.mrf.mxu0
    %v991 = vadd.f32 0.0, %v990
    %v992 = vpop.f32.mrf.mxu0
    %v993 = vadd.f32 0.0, %v992
    %994 = vdwg.mxu0
    %995 = vmatprep.subr.mxu0 %v115
    %996 = vmatpush1.msra.mxu0 %v114
    %997 = vmatprep.subr.mxu0 %v111
    %998 = vmatpush1.msra.mxu0 %v110
    %999 = vmatprep.subr.mxu0 %v107
    %1000 = vmatpush1.msra.mxu0 %v106
    %1001 = vmatprep.subr.mxu0 %v103
    %1002 = vmatpush1.msra.mxu0 %v102
    %1003 = vmatprep.subr.mxu0 %v99
    %1004 = vmatpush1.msra.mxu0 %v98
    %1005 = vmatprep.subr.mxu0 %v95
    %1006 = vmatpush1.msra.mxu0 %v94
    %1007 = vmatprep.subr.mxu0 %v91
    %1008 = vmatpush1.msra.mxu0 %v90
    %1009 = vmatprep.subr.mxu0 %v87
    %1010 = vmatpush1.msra.mxu0 %v86
    %1011 = vmatprep.subr.mxu0 %v83
    %1012 = vmatpush1.msra.mxu0 %v82
    %1013 = vmatprep.subr.mxu0 %v79
    %1014 = vmatpush1.msra.mxu0 %v78
    %1015 = vmatprep.subr.mxu0 %v75
    %1016 = vmatpush1.msra.mxu0 %v74
    %1017 = vmatprep.subr.mxu0 %v71
    %1018 = vmatpush1.msra.mxu0 %v70
    %1019 = vmatprep.subr.mxu0 %v67
    %1020 = vmatpush1.msra.mxu0 %v66
    %1021 = vmatprep.subr.mxu0 %v63
    %1022 = vmatpush1.msra.mxu0 %v62
    %1023 = vmatprep.subr.mxu0 %v59
    %1024 = vmatpush1.msra.mxu0 %v58
    %1025 = vmatprep.subr.mxu0 %v55
    %1026 = vmatpush1.msra.mxu0 %v54
    %1027 = vmatprep.subr.mxu0 0.0
    %1028 = vmatpush2.msra.mxu0 0.0
    %1029 = vmatprep.subr.mxu0 0.0
    %1030 = vmatpush2.msra.mxu0 0.0
    %1031 = vmatprep.subr.mxu0 0.0
    %1032 = vmatpush2.msra.mxu0 0.0
    %1033 = vmatprep.subr.mxu0 0.0
    %1034 = vmatpush2.msra.mxu0 0.0
    %1035 = vmatprep.subr.mxu0 0.0
    %1036 = vmatpush2.msra.mxu0 0.0
    %1037 = vmatprep.subr.mxu0 0.0
    %1038 = vmatpush2.msra.mxu0 0.0
    %1039 = vmatprep.subr.mxu0 0.0
    %1040 = vmatpush2.msra.mxu0 0.0
    %1041 = vmatprep.subr.mxu0 0.0
    %1042 = vmatpush2.msra.mxu0 0.0
    %1043 = vmatprep.subr.mxu0 0.0
    %1044 = vmatpush2.msra.mxu0 0.0
    %1045 = vmatprep.subr.mxu0 0.0
    %1046 = vmatpush2.msra.mxu0 0.0
    %1047 = vmatprep.subr.mxu0 0.0
    %1048 = vmatpush2.msra.mxu0 0.0
    %1049 = vmatprep.subr.mxu0 0.0
    %1050 = vmatpush2.msra.mxu0 0.0
    %1051 = vmatprep.subr.mxu0 0.0
    %1052 = vmatpush2.msra.mxu0 0.0
    %1053 = vmatprep.subr.mxu0 0.0
    %1054 = vmatpush2.msra.mxu0 0.0
    %1055 = vmatprep.subr.mxu0 0.0
    %1056 = vmatpush2.msra.mxu0 0.0
    %1057 = vmatprep.subr.mxu0 0.0
    %1058 = vmatpush2.msra.mxu0 0.0
    %1059 = vmatprep.mubr.f32.mxu0 0.0
    %1060 = vmatmul.mubr.f32.gmra.mxu0 %v923
    %v1061 = vpop.f32.mrf.mxu0
    %v1062 = vadd.f32 0.0, %v1061
    %v1063 = vpop.f32.mrf.mxu0
    %v1064 = vadd.f32 0.0, %v1063
    %1065 = vdwg.mxu0
    %v1066 = vadd.f32 %v273, %v991
    %v1067 = vadd.f32 %v275, %v993
    %v1068 = vadd.f32 %v386, %v1062
    %v1069 = vadd.f32 %v388, %v1064
    %v1070 = vxor.u32 %v1066, 2147483648
    %v1071 = vmul.f32 %v1070, 1.442695
    %v1072 = vpow.pop %v1071
    %v1073 = vadd.f32 %v1072, 1.0
    %v1074 = vrcp.pop %v1073
    %v1075 = vmul.f32 1.0, %v1074
    %v1076 = vxor.u32 %v1067, 2147483648
    %v1077 = vmul.f32 %v1076, 1.442695
    %v1078 = vpow.pop %v1077
    %v1079 = vadd.f32 %v1078, 1.0
    %v1080 = vrcp.pop %v1079
    %v1081 = vmul.f32 1.0, %v1080
    %v1082 = vtanh.pop %v1068
    %v1083 = vxor.u32 %v1069, 2147483648
    %v1084 = vmul.f32 %v1083, 1.442695
    %v1085 = vpow.pop %v1084
    %v1086 = vadd.f32 %v1085, 1.0
    %v1087 = vrcp.pop %v1086
    %v1088 = vmul.f32 1.0, %v1087
    %v1089 = vmul.f32 %v1081, %v921
    %v1090 = vmul.f32 %v1075, %v1082
    %v1091 = vadd.f32 %v1089, %v1090
    %v1092 = vtanh.pop %v1091
    %v1093 = vmul.f32 %v1088, %v1092
    %1094 = vmatprep.subr.mxu0 %v113
    %1095 = vmatpush1.msra.mxu0 %v112
    %1096 = vmatprep.subr.mxu0 %v109
    %1097 = vmatpush1.msra.mxu0 %v108
    %1098 = vmatprep.subr.mxu0 %v105
    %1099 = vmatpush1.msra.mxu0 %v104
    %1100 = vmatprep.subr.mxu0 %v101
    %1101 = vmatpush1.msra.mxu0 %v100
    %1102 = vmatprep.subr.mxu0 %v97
    %1103 = vmatpush1.msra.mxu0 %v96
    %1104 = vmatprep.subr.mxu0 %v93
    %1105 = vmatpush1.msra.mxu0 %v92
    %1106 = vmatprep.subr.mxu0 %v89
    %1107 = vmatpush1.msra.mxu0 %v88
    %1108 = vmatprep.subr.mxu0 %v85
    %1109 = vmatpush1.msra.mxu0 %v84
    %1110 = vmatprep.subr.mxu0 %v81
    %1111 = vmatpush1.msra.mxu0 %v80
    %1112 = vmatprep.subr.mxu0 %v77
    %1113 = vmatpush1.msra.mxu0 %v76
    %1114 = vmatprep.subr.mxu0 %v73
    %1115 = vmatpush1.msra.mxu0 %v72
    %1116 = vmatprep.subr.mxu0 %v69
    %1117 = vmatpush1.msra.mxu0 %v68
    %1118 = vmatprep.subr.mxu0 %v65
    %1119 = vmatpush1.msra.mxu0 %v64
    %1120 = vmatprep.subr.mxu0 %v61
    %1121 = vmatpush1.msra.mxu0 %v60
    %1122 = vmatprep.subr.mxu0 %v57
    %1123 = vmatpush1.msra.mxu0 %v56
    %1124 = vmatprep.subr.mxu0 %v53
    %1125 = vmatpush1.msra.mxu0 %v52
    %1126 = vmatprep.subr.mxu0 0.0
    %1127 = vmatpush2.msra.mxu0 0.0
    %1128 = vmatprep.subr.mxu0 0.0
    %1129 = vmatpush2.msra.mxu0 0.0
    %1130 = vmatprep.subr.mxu0 0.0
    %1131 = vmatpush2.msra.mxu0 0.0
    %1132 = vmatprep.subr.mxu0 0.0
    %1133 = vmatpush2.msra.mxu0 0.0
    %1134 = vmatprep.subr.mxu0 0.0
    %1135 = vmatpush2.msra.mxu0 0.0
    %1136 = vmatprep.subr.mxu0 0.0
    %1137 = vmatpush2.msra.mxu0 0.0
    %1138 = vmatprep.subr.mxu0 0.0
    %1139 = vmatpush2.msra.mxu0 0.0
    %1140 = vmatprep.subr.mxu0 0.0
    %1141 = vmatpush2.msra.mxu0 0.0
    %1142 = vmatprep.subr.mxu0 0.0
    %1143 = vmatpush2.msra.mxu0 0.0
    %1144 = vmatprep.subr.mxu0 0.0
    %1145 = vmatpush2.msra.mxu0 0.0
    %1146 = vmatprep.subr.mxu0 0.0
    %1147 = vmatpush2.msra.mxu0 0.0
    %1148 = vmatprep.subr.mxu0 0.0
    %1149 = vmatpush2.msra.mxu0 0.0
    %1150 = vmatprep.subr.mxu0 0.0
    %1151 = vmatpush2.msra.mxu0 0.0
    %1152 = vmatprep.subr.mxu0 0.0
    %1153 = vmatpush2.msra.mxu0 0.0
    %1154 = vmatprep.subr.mxu0 0.0
    %1155 = vmatpush2.msra.mxu0 0.0
    %1156 = vmatprep.subr.mxu0 0.0
    %1157 = vmatpush2.msra.mxu0 0.0
    %1158 = vmatprep.mubr.f32.mxu0 0.0
    %1159 = vmatmul.mubr.f32.gmra.mxu0 %v1093
    %v1160 = vpop.f32.mrf.mxu0
    %v1161 = vadd.f32 0.0, %v1160
    %v1162 = vpop.f32.mrf.mxu0
    %v1163 = vadd.f32 0.0, %v1162
    %1164 = vdwg.mxu0
    %1165 = vmatprep.subr.mxu0 %v115
    %1166 = vmatpush1.msra.mxu0 %v114
    %1167 = vmatprep.subr.mxu0 %v111
    %1168 = vmatpush1.msra.mxu0 %v110
    %1169 = vmatprep.subr.mxu0 %v107
    %1170 = vmatpush1.msra.mxu0 %v106
    %1171 = vmatprep.subr.mxu0 %v103
    %1172 = vmatpush1.msra.mxu0 %v102
    %1173 = vmatprep.subr.mxu0 %v99
    %1174 = vmatpush1.msra.mxu0 %v98
    %1175 = vmatprep.subr.mxu0 %v95
    %1176 = vmatpush1.msra.mxu0 %v94
    %1177 = vmatprep.subr.mxu0 %v91
    %1178 = vmatpush1.msra.mxu0 %v90
    %1179 = vmatprep.subr.mxu0 %v87
    %1180 = vmatpush1.msra.mxu0 %v86
    %1181 = vmatprep.subr.mxu0 %v83
    %1182 = vmatpush1.msra.mxu0 %v82
    %1183 = vmatprep.subr.mxu0 %v79
    %1184 = vmatpush1.msra.mxu0 %v78
    %1185 = vmatprep.subr.mxu0 %v75
    %1186 = vmatpush1.msra.mxu0 %v74
    %1187 = vmatprep.subr.mxu0 %v71
    %1188 = vmatpush1.msra.mxu0 %v70
    %1189 = vmatprep.subr.mxu0 %v67
    %1190 = vmatpush1.msra.mxu0 %v66
    %1191 = vmatprep.subr.mxu0 %v63
    %1192 = vmatpush1.msra.mxu0 %v62
    %1193 = vmatprep.subr.mxu0 %v59
    %1194 = vmatpush1.msra.mxu0 %v58
    %1195 = vmatprep.subr.mxu0 %v55
    %1196 = vmatpush1.msra.mxu0 %v54
    %1197 = vmatprep.subr.mxu0 0.0
    %1198 = vmatpush2.msra.mxu0 0.0
    %1199 = vmatprep.subr.mxu0 0.0
    %1200 = vmatpush2.msra.mxu0 0.0
    %1201 = vmatprep.subr.mxu0 0.0
    %1202 = vmatpush2.msra.mxu0 0.0
    %1203 = vmatprep.subr.mxu0 0.0
    %1204 = vmatpush2.msra.mxu0 0.0
    %1205 = vmatprep.subr.mxu0 0.0
    %1206 = vmatpush2.msra.mxu0 0.0
    %1207 = vmatprep.subr.mxu0 0.0
    %1208 = vmatpush2.msra.mxu0 0.0
    %1209 = vmatprep.subr.mxu0 0.0
    %1210 = vmatpush2.msra.mxu0 0.0
    %1211 = vmatprep.subr.mxu0 0.0
    %1212 = vmatpush2.msra.mxu0 0.0
    %1213 = vmatprep.subr.mxu0 0.0
    %1214 = vmatpush2.msra.mxu0 0.0
    %1215 = vmatprep.subr.mxu0 0.0
    %1216 = vmatpush2.msra.mxu0 0.0
    %1217 = vmatprep.subr.mxu0 0.0
    %1218 = vmatpush2.msra.mxu0 0.0
    %1219 = vmatprep.subr.mxu0 0.0
    %1220 = vmatpush2.msra.mxu0 0.0
    %1221 = vmatprep.subr.mxu0 0.0
    %1222 = vmatpush2.msra.mxu0 0.0
    %1223 = vmatprep.subr.mxu0 0.0
    %1224 = vmatpush2.msra.mxu0 0.0
    %1225 = vmatprep.subr.mxu0 0.0
    %1226 = vmatpush2.msra.mxu0 0.0
    %1227 = vmatprep.subr.mxu0 0.0
    %1228 = vmatpush2.msra.mxu0 0.0
    %1229 = vmatprep.mubr.f32.mxu0 0.0
    %1230 = vmatmul.mubr.f32.gmra.mxu0 %v1093
    %v1231 = vpop.f32.mrf.mxu0
    %v1232 = vadd.f32 0.0, %v1231
    %v1233 = vpop.f32.mrf.mxu0
    %v1234 = vadd.f32 0.0, %v1233
    %1235 = vdwg.mxu0
    %v1236 = vadd.f32 %v279, %v1161
    %v1237 = vadd.f32 %v281, %v1163
    %v1238 = vadd.f32 %v392, %v1232
    %v1239 = vadd.f32 %v394, %v1234
    %v1240 = vxor.u32 %v1236, 2147483648
    %v1241 = vmul.f32 %v1240, 1.442695
    %v1242 = vpow.pop %v1241
    %v1243 = vadd.f32 %v1242, 1.0
    %v1244 = vrcp.pop %v1243
    %v1245 = vmul.f32 1.0, %v1244
    %v1246 = vxor.u32 %v1237, 2147483648
    %v1247 = vmul.f32 %v1246, 1.442695
    %v1248 = vpow.pop %v1247
    %v1249 = vadd.f32 %v1248, 1.0
    %v1250 = vrcp.pop %v1249
    %v1251 = vmul.f32 1.0, %v1250
    %v1252 = vtanh.pop %v1238
    %v1253 = vxor.u32 %v1239, 2147483648
    %v1254 = vmul.f32 %v1253, 1.442695
    %v1255 = vpow.pop %v1254
    %v1256 = vadd.f32 %v1255, 1.0
    %v1257 = vrcp.pop %v1256
    %v1258 = vmul.f32 1.0, %v1257
    %v1259 = vmul.f32 %v1251, %v1091
    %v1260 = vmul.f32 %v1245, %v1252
    %v1261 = vadd.f32 %v1259, %v1260
    %v1262 = vtanh.pop %v1261
    %v1263 = vmul.f32 %v1258, %v1262
    %1264 = vmatprep.subr.mxu0 %v113
    %1265 = vmatpush1.msra.mxu0 %v112
    %1266 = vmatprep.subr.mxu0 %v109
    %1267 = vmatpush1.msra.mxu0 %v108
    %1268 = vmatprep.subr.mxu0 %v105
    %1269 = vmatpush1.msra.mxu0 %v104
    %1270 = vmatprep.subr.mxu0 %v101
    %1271 = vmatpush1.msra.mxu0 %v100
    %1272 = vmatprep.subr.mxu0 %v97
    %1273 = vmatpush1.msra.mxu0 %v96
    %1274 = vmatprep.subr.mxu0 %v93
    %1275 = vmatpush1.msra.mxu0 %v92
    %1276 = vmatprep.subr.mxu0 %v89
    %1277 = vmatpush1.msra.mxu0 %v88
    %1278 = vmatprep.subr.mxu0 %v85
    %1279 = vmatpush1.msra.mxu0 %v84
    %1280 = vmatprep.subr.mxu0 %v81
    %1281 = vmatpush1.msra.mxu0 %v80
    %1282 = vmatprep.subr.mxu0 %v77
    %1283 = vmatpush1.msra.mxu0 %v76
    %1284 = vmatprep.subr.mxu0 %v73
    %1285 = vmatpush1.msra.mxu0 %v72
    %1286 = vmatprep.subr.mxu0 %v69
    %1287 = vmatpush1.msra.mxu0 %v68
    %1288 = vmatprep.subr.mxu0 %v65
    %1289 = vmatpush1.msra.mxu0 %v64
    %1290 = vmatprep.subr.mxu0 %v61
    %1291 = vmatpush1.msra.mxu0 %v60
    %1292 = vmatprep.subr.mxu0 %v57
    %1293 = vmatpush1.msra.mxu0 %v56
    %1294 = vmatprep.subr.mxu0 %v53
    %1295 = vmatpush1.msra.mxu0 %v52
    %1296 = vmatprep.subr.mxu0 0.0
    %1297 = vmatpush2.msra.mxu0 0.0
    %1298 = vmatprep.subr.mxu0 0.0
    %1299 = vmatpush2.msra.mxu0 0.0
    %1300 = vmatprep.subr.mxu0 0.0
    %1301 = vmatpush2.msra.mxu0 0.0
    %1302 = vmatprep.subr.mxu0 0.0
    %1303 = vmatpush2.msra.mxu0 0.0
    %1304 = vmatprep.subr.mxu0 0.0
    %1305 = vmatpush2.msra.mxu0 0.0
    %1306 = vmatprep.subr.mxu0 0.0
    %1307 = vmatpush2.msra.mxu0 0.0
    %1308 = vmatprep.subr.mxu0 0.0
    %1309 = vmatpush2.msra.mxu0 0.0
    %1310 = vmatprep.subr.mxu0 0.0
    %1311 = vmatpush2.msra.mxu0 0.0
    %1312 = vmatprep.subr.mxu0 0.0
    %1313 = vmatpush2.msra.mxu0 0.0
    %1314 = vmatprep.subr.mxu0 0.0
    %1315 = vmatpush2.msra.mxu0 0.0
    %1316 = vmatprep.subr.mxu0 0.0
    %1317 = vmatpush2.msra.mxu0 0.0
    %1318 = vmatprep.subr.mxu0 0.0
    %1319 = vmatpush2.msra.mxu0 0.0
    %1320 = vmatprep.subr.mxu0 0.0
    %1321 = vmatpush2.msra.mxu0 0.0
    %1322 = vmatprep.subr.mxu0 0.0
    %1323 = vmatpush2.msra.mxu0 0.0
    %1324 = vmatprep.subr.mxu0 0.0
    %1325 = vmatpush2.msra.mxu0 0.0
    %1326 = vmatprep.subr.mxu0 0.0
    %1327 = vmatpush2.msra.mxu0 0.0
    %1328 = vmatprep.mubr.f32.mxu0 0.0
    %1329 = vmatmul.mubr.f32.gmra.mxu0 %v1263
    %v1330 = vpop.f32.mrf.mxu0
    %v1331 = vadd.f32 0.0, %v1330
    %v1332 = vpop.f32.mrf.mxu0
    %v1333 = vadd.f32 0.0, %v1332
    %1334 = vdwg.mxu0
    %1335 = vmatprep.subr.mxu0 %v115
    %1336 = vmatpush1.msra.mxu0 %v114
    %1337 = vmatprep.subr.mxu0 %v111
    %1338 = vmatpush1.msra.mxu0 %v110
    %1339 = vmatprep.subr.mxu0 %v107
    %1340 = vmatpush1.msra.mxu0 %v106
    %1341 = vmatprep.subr.mxu0 %v103
    %1342 = vmatpush1.msra.mxu0 %v102
    %1343 = vmatprep.subr.mxu0 %v99
    %1344 = vmatpush1.msra.mxu0 %v98
    %1345 = vmatprep.subr.mxu0 %v95
    %1346 = vmatpush1.msra.mxu0 %v94
    %1347 = vmatprep.subr.mxu0 %v91
    %1348 = vmatpush1.msra.mxu0 %v90
    %1349 = vmatprep.subr.mxu0 %v87
    %1350 = vmatpush1.msra.mxu0 %v86
    %1351 = vmatprep.subr.mxu0 %v83
    %1352 = vmatpush1.msra.mxu0 %v82
    %1353 = vmatprep.subr.mxu0 %v79
    %1354 = vmatpush1.msra.mxu0 %v78
    %1355 = vmatprep.subr.mxu0 %v75
    %1356 = vmatpush1.msra.mxu0 %v74
    %1357 = vmatprep.subr.mxu0 %v71
    %1358 = vmatpush1.msra.mxu0 %v70
    %1359 = vmatprep.subr.mxu0 %v67
    %1360 = vmatpush1.msra.mxu0 %v66
    %1361 = vmatprep.subr.mxu0 %v63
    %1362 = vmatpush1.msra.mxu0 %v62
    %1363 = vmatprep.subr.mxu0 %v59
    %1364 = vmatpush1.msra.mxu0 %v58
    %1365 = vmatprep.subr.mxu0 %v55
    %1366 = vmatpush1.msra.mxu0 %v54
    %1367 = vmatprep.subr.mxu0 0.0
    %1368 = vmatpush2.msra.mxu0 0.0
    %1369 = vmatprep.subr.mxu0 0.0
    %1370 = vmatpush2.msra.mxu0 0.0
    %1371 = vmatprep.subr.mxu0 0.0
    %1372 = vmatpush2.msra.mxu0 0.0
    %1373 = vmatprep.subr.mxu0 0.0
    %1374 = vmatpush2.msra.mxu0 0.0
    %1375 = vmatprep.subr.mxu0 0.0
    %1376 = vmatpush2.msra.mxu0 0.0
    %1377 = vmatprep.subr.mxu0 0.0
    %1378 = vmatpush2.msra.mxu0 0.0
    %1379 = vmatprep.subr.mxu0 0.0
    %1380 = vmatpush2.msra.mxu0 0.0
    %1381 = vmatprep.subr.mxu0 0.0
    %1382 = vmatpush2.msra.mxu0 0.0
    %1383 = vmatprep.subr.mxu0 0.0
    %1384 = vmatpush2.msra.mxu0 0.0
    %1385 = vmatprep.subr.mxu0 0.0
    %1386 = vmatpush2.msra.mxu0 0.0
    %1387 = vmatprep.subr.mxu0 0.0
    %1388 = vmatpush2.msra.mxu0 0.0
    %1389 = vmatprep.subr.mxu0 0.0
    %1390 = vmatpush2.msra.mxu0 0.0
    %1391 = vmatprep.subr.mxu0 0.0
    %1392 = vmatpush2.msra.mxu0 0.0
    %1393 = vmatprep.subr.mxu0 0.0
    %1394 = vmatpush2.msra.mxu0 0.0
    %1395 = vmatprep.subr.mxu0 0.0
    %1396 = vmatpush2.msra.mxu0 0.0
    %1397 = vmatprep.subr.mxu0 0.0
    %1398 = vmatpush2.msra.mxu0 0.0
    %1399 = vmatprep.mubr.f32.mxu0 0.0
    %1400 = vmatmul.mubr.f32.gmra.mxu0 %v1263
    %v1401 = vpop.f32.mrf.mxu0
    %v1402 = vadd.f32 0.0, %v1401
    %v1403 = vpop.f32.mrf.mxu0
    %v1404 = vadd.f32 0.0, %v1403
    %1405 = vdwg.mxu0
    %v1406 = vadd.f32 %v285, %v1331
    %v1407 = vadd.f32 %v287, %v1333
    %v1408 = vadd.f32 %v398, %v1402
    %v1409 = vadd.f32 %v400, %v1404
    %v1410 = vxor.u32 %v1406, 2147483648
    %v1411 = vmul.f32 %v1410, 1.442695
    %v1412 = vpow.pop %v1411
    %v1413 = vadd.f32 %v1412, 1.0
    %v1414 = vrcp.pop %v1413
    %v1415 = vmul.f32 1.0, %v1414
    %v1416 = vxor.u32 %v1407, 2147483648
    %v1417 = vmul.f32 %v1416, 1.442695
    %v1418 = vpow.pop %v1417
    %v1419 = vadd.f32 %v1418, 1.0
    %v1420 = vrcp.pop %v1419
    %v1421 = vmul.f32 1.0, %v1420
    %v1422 = vtanh.pop %v1408
    %v1423 = vxor.u32 %v1409, 2147483648
    %v1424 = vmul.f32 %v1423, 1.442695
    %v1425 = vpow.pop %v1424
    %v1426 = vadd.f32 %v1425, 1.0
    %v1427 = vrcp.pop %v1426
    %v1428 = vmul.f32 1.0, %v1427
    %v1429 = vmul.f32 %v1421, %v1261
    %v1430 = vmul.f32 %v1415, %v1422
    %v1431 = vadd.f32 %v1429, %v1430
    %v1432 = vtanh.pop %v1431
    %v1433 = vmul.f32 %v1428, %v1432
    %1434 = vmatprep.subr.mxu0 %v113
    %1435 = vmatpush1.msra.mxu0 %v112
    %1436 = vmatprep.subr.mxu0 %v109
    %1437 = vmatpush1.msra.mxu0 %v108
    %1438 = vmatprep.subr.mxu0 %v105
    %1439 = vmatpush1.msra.mxu0 %v104
    %1440 = vmatprep.subr.mxu0 %v101
    %1441 = vmatpush1.msra.mxu0 %v100
    %1442 = vmatprep.subr.mxu0 %v97
    %1443 = vmatpush1.msra.mxu0 %v96
    %1444 = vmatprep.subr.mxu0 %v93
    %1445 = vmatpush1.msra.mxu0 %v92
    %1446 = vmatprep.subr.mxu0 %v89
    %1447 = vmatpush1.msra.mxu0 %v88
    %1448 = vmatprep.subr.mxu0 %v85
    %1449 = vmatpush1.msra.mxu0 %v84
    %1450 = vmatprep.subr.mxu0 %v81
    %1451 = vmatpush1.msra.mxu0 %v80
    %1452 = vmatprep.subr.mxu0 %v77
    %1453 = vmatpush1.msra.mxu0 %v76
    %1454 = vmatprep.subr.mxu0 %v73
    %1455 = vmatpush1.msra.mxu0 %v72
    %1456 = vmatprep.subr.mxu0 %v69
    %1457 = vmatpush1.msra.mxu0 %v68
    %1458 = vmatprep.subr.mxu0 %v65
    %1459 = vmatpush1.msra.mxu0 %v64
    %1460 = vmatprep.subr.mxu0 %v61
    %1461 = vmatpush1.msra.mxu0 %v60
    %1462 = vmatprep.subr.mxu0 %v57
    %1463 = vmatpush1.msra.mxu0 %v56
    %1464 = vmatprep.subr.mxu0 %v53
    %1465 = vmatpush1.msra.mxu0 %v52
    %1466 = vmatprep.subr.mxu0 0.0
    %1467 = vmatpush2.msra.mxu0 0.0
    %1468 = vmatprep.subr.mxu0 0.0
    %1469 = vmatpush2.msra.mxu0 0.0
    %1470 = vmatprep.subr.mxu0 0.0
    %1471 = vmatpush2.msra.mxu0 0.0
    %1472 = vmatprep.subr.mxu0 0.0
    %1473 = vmatpush2.msra.mxu0 0.0
    %1474 = vmatprep.subr.mxu0 0.0
    %1475 = vmatpush2.msra.mxu0 0.0
    %1476 = vmatprep.subr.mxu0 0.0
    %1477 = vmatpush2.msra.mxu0 0.0
    %1478 = vmatprep.subr.mxu0 0.0
    %1479 = vmatpush2.msra.mxu0 0.0
    %1480 = vmatprep.subr.mxu0 0.0
    %1481 = vmatpush2.msra.mxu0 0.0
    %1482 = vmatprep.subr.mxu0 0.0
    %1483 = vmatpush2.msra.mxu0 0.0
    %1484 = vmatprep.subr.mxu0 0.0
    %1485 = vmatpush2.msra.mxu0 0.0
    %1486 = vmatprep.subr.mxu0 0.0
    %1487 = vmatpush2.msra.mxu0 0.0
    %1488 = vmatprep.subr.mxu0 0.0
    %1489 = vmatpush2.msra.mxu0 0.0
    %1490 = vmatprep.subr.mxu0 0.0
    %1491 = vmatpush2.msra.mxu0 0.0
    %1492 = vmatprep.subr.mxu0 0.0
    %1493 = vmatpush2.msra.mxu0 0.0
    %1494 = vmatprep.subr.mxu0 0.0
    %1495 = vmatpush2.msra.mxu0 0.0
    %1496 = vmatprep.subr.mxu0 0.0
    %1497 = vmatpush2.msra.mxu0 0.0
    %1498 = vmatprep.mubr.f32.mxu0 0.0
    %1499 = vmatmul.mubr.f32.gmra.mxu0 %v1433
    %v1500 = vpop.f32.mrf.mxu0
    %v1501 = vadd.f32 0.0, %v1500
    %v1502 = vpop.f32.mrf.mxu0
    %v1503 = vadd.f32 0.0, %v1502
    %1504 = vdwg.mxu0
    %1505 = vmatprep.subr.mxu0 %v115
    %1506 = vmatpush1.msra.mxu0 %v114
    %1507 = vmatprep.subr.mxu0 %v111
    %1508 = vmatpush1.msra.mxu0 %v110
    %1509 = vmatprep.subr.mxu0 %v107
    %1510 = vmatpush1.msra.mxu0 %v106
    %1511 = vmatprep.subr.mxu0 %v103
    %1512 = vmatpush1.msra.mxu0 %v102
    %1513 = vmatprep.subr.mxu0 %v99
    %1514 = vmatpush1.msra.mxu0 %v98
    %1515 = vmatprep.subr.mxu0 %v95
    %1516 = vmatpush1.msra.mxu0 %v94
    %1517 = vmatprep.subr.mxu0 %v91
    %1518 = vmatpush1.msra.mxu0 %v90
    %1519 = vmatprep.subr.mxu0 %v87
    %1520 = vmatpush1.msra.mxu0 %v86
    %1521 = vmatprep.subr.mxu0 %v83
    %1522 = vmatpush1.msra.mxu0 %v82
    %1523 = vmatprep.subr.mxu0 %v79
    %1524 = vmatpush1.msra.mxu0 %v78
    %1525 = vmatprep.subr.mxu0 %v75
    %1526 = vmatpush1.msra.mxu0 %v74
    %1527 = vmatprep.subr.mxu0 %v71
    %1528 = vmatpush1.msra.mxu0 %v70
    %1529 = vmatprep.subr.mxu0 %v67
    %1530 = vmatpush1.msra.mxu0 %v66
    %1531 = vmatprep.subr.mxu0 %v63
    %1532 = vmatpush1.msra.mxu0 %v62
    %1533 = vmatprep.subr.mxu0 %v59
    %1534 = vmatpush1.msra.mxu0 %v58
    %1535 = vmatprep.subr.mxu0 %v55
    %1536 = vmatpush1.msra.mxu0 %v54
    %1537 = vmatprep.subr.mxu0 0.0
    %1538 = vmatpush2.msra.mxu0 0.0
    %1539 = vmatprep.subr.mxu0 0.0
    %1540 = vmatpush2.msra.mxu0 0.0
    %1541 = vmatprep.subr.mxu0 0.0
    %1542 = vmatpush2.msra.mxu0 0.0
    %1543 = vmatprep.subr.mxu0 0.0
    %1544 = vmatpush2.msra.mxu0 0.0
    %1545 = vmatprep.subr.mxu0 0.0
    %1546 = vmatpush2.msra.mxu0 0.0
    %1547 = vmatprep.subr.mxu0 0.0
    %1548 = vmatpush2.msra.mxu0 0.0
    %1549 = vmatprep.subr.mxu0 0.0
    %1550 = vmatpush2.msra.mxu0 0.0
    %1551 = vmatprep.subr.mxu0 0.0
    %1552 = vmatpush2.msra.mxu0 0.0
    %1553 = vmatprep.subr.mxu0 0.0
    %1554 = vmatpush2.msra.mxu0 0.0
    %1555 = vmatprep.subr.mxu0 0.0
    %1556 = vmatpush2.msra.mxu0 0.0
    %1557 = vmatprep.subr.mxu0 0.0
    %1558 = vmatpush2.msra.mxu0 0.0
    %1559 = vmatprep.subr.mxu0 0.0
    %1560 = vmatpush2.msra.mxu0 0.0
    %1561 = vmatprep.subr.mxu0 0.0
    %1562 = vmatpush2.msra.mxu0 0.0
    %1563 = vmatprep.subr.mxu0 0.0
    %1564 = vmatpush2.msra.mxu0 0.0
    %1565 = vmatprep.subr.mxu0 0.0
    %1566 = vmatpush2.msra.mxu0 0.0
    %1567 = vmatprep.subr.mxu0 0.0
    %1568 = vmatpush2.msra.mxu0 0.0
    %1569 = vmatprep.mubr.f32.mxu0 0.0
    %1570 = vmatmul.mubr.f32.gmra.mxu0 %v1433
    %v1571 = vpop.f32.mrf.mxu0
    %v1572 = vadd.f32 0.0, %v1571
    %v1573 = vpop.f32.mrf.mxu0
    %v1574 = vadd.f32 0.0, %v1573
    %1575 = vdwg.mxu0
    %v1576 = vadd.f32 %v291, %v1501
    %v1577 = vadd.f32 %v293, %v1503
    %v1578 = vadd.f32 %v404, %v1572
    %v1579 = vadd.f32 %v406, %v1574
    %v1580 = vxor.u32 %v1576, 2147483648
    %v1581 = vmul.f32 %v1580, 1.442695
    %v1582 = vpow.pop %v1581
    %v1583 = vadd.f32 %v1582, 1.0
    %v1584 = vrcp.pop %v1583
    %v1585 = vmul.f32 1.0, %v1584
    %v1586 = vxor.u32 %v1577, 2147483648
    %v1587 = vmul.f32 %v1586, 1.442695
    %v1588 = vpow.pop %v1587
    %v1589 = vadd.f32 %v1588, 1.0
    %v1590 = vrcp.pop %v1589
    %v1591 = vmul.f32 1.0, %v1590
    %v1592 = vtanh.pop %v1578
    %v1593 = vxor.u32 %v1579, 2147483648
    %v1594 = vmul.f32 %v1593, 1.442695
    %v1595 = vpow.pop %v1594
    %v1596 = vadd.f32 %v1595, 1.0
    %v1597 = vrcp.pop %v1596
    %v1598 = vmul.f32 1.0, %v1597
    %v1599 = vmul.f32 %v1591, %v1431
    %v1600 = vmul.f32 %v1585, %v1592
    %v1601 = vadd.f32 %v1599, %v1600
    %v1602 = vtanh.pop %v1601
    %v1603 = vmul.f32 %v1598, %v1602
    %1604 = vmatprep.subr.mxu0 %v113
    %1605 = vmatpush1.msra.mxu0 %v112
    %1606 = vmatprep.subr.mxu0 %v109
    %1607 = vmatpush1.msra.mxu0 %v108
    %1608 = vmatprep.subr.mxu0 %v105
    %1609 = vmatpush1.msra.mxu0 %v104
    %1610 = vmatprep.subr.mxu0 %v101
    %1611 = vmatpush1.msra.mxu0 %v100
    %1612 = vmatprep.subr.mxu0 %v97
    %1613 = vmatpush1.msra.mxu0 %v96
    %1614 = vmatprep.subr.mxu0 %v93
    %1615 = vmatpush1.msra.mxu0 %v92
    %1616 = vmatprep.subr.mxu0 %v89
    %1617 = vmatpush1.msra.mxu0 %v88
    %1618 = vmatprep.subr.mxu0 %v85
    %1619 = vmatpush1.msra.mxu0 %v84
    %1620 = vmatprep.subr.mxu0 %v81
    %1621 = vmatpush1.msra.mxu0 %v80
    %1622 = vmatprep.subr.mxu0 %v77
    %1623 = vmatpush1.msra.mxu0 %v76
    %1624 = vmatprep.subr.mxu0 %v73
    %1625 = vmatpush1.msra.mxu0 %v72
    %1626 = vmatprep.subr.mxu0 %v69
    %1627 = vmatpush1.msra.mxu0 %v68
    %1628 = vmatprep.subr.mxu0 %v65
    %1629 = vmatpush1.msra.mxu0 %v64
    %1630 = vmatprep.subr.mxu0 %v61
    %1631 = vmatpush1.msra.mxu0 %v60
    %1632 = vmatprep.subr.mxu0 %v57
    %1633 = vmatpush1.msra.mxu0 %v56
    %1634 = vmatprep.subr.mxu0 %v53
    %1635 = vmatpush1.msra.mxu0 %v52
    %1636 = vmatprep.subr.mxu0 0.0
    %1637 = vmatpush2.msra.mxu0 0.0
    %1638 = vmatprep.subr.mxu0 0.0
    %1639 = vmatpush2.msra.mxu0 0.0
    %1640 = vmatprep.subr.mxu0 0.0
    %1641 = vmatpush2.msra.mxu0 0.0
    %1642 = vmatprep.subr.mxu0 0.0
    %1643 = vmatpush2.msra.mxu0 0.0
    %1644 = vmatprep.subr.mxu0 0.0
    %1645 = vmatpush2.msra.mxu0 0.0
    %1646 = vmatprep.subr.mxu0 0.0
    %1647 = vmatpush2.msra.mxu0 0.0
    %1648 = vmatprep.subr.mxu0 0.0
    %1649 = vmatpush2.msra.mxu0 0.0
    %1650 = vmatprep.subr.mxu0 0.0
    %1651 = vmatpush2.msra.mxu0 0.0
    %1652 = vmatprep.subr.mxu0 0.0
    %1653 = vmatpush2.msra.mxu0 0.0
    %1654 = vmatprep.subr.mxu0 0.0
    %1655 = vmatpush2.msra.mxu0 0.0
    %1656 = vmatprep.subr.mxu0 0.0
    %1657 = vmatpush2.msra.mxu0 0.0
    %1658 = vmatprep.subr.mxu0 0.0
    %1659 = vmatpush2.msra.mxu0 0.0
    %1660 = vmatprep.subr.mxu0 0.0
    %1661 = vmatpush2.msra.mxu0 0.0
    %1662 = vmatprep.subr.mxu0 0.0
    %1663 = vmatpush2.msra.mxu0 0.0
    %1664 = vmatprep.subr.mxu0 0.0
    %1665 = vmatpush2.msra.mxu0 0.0
    %1666 = vmatprep.subr.mxu0 0.0
    %1667 = vmatpush2.msra.mxu0 0.0
    %1668 = vmatprep.mubr.f32.mxu0 0.0
    %1669 = vmatmul.mubr.f32.gmra.mxu0 %v1603
    %v1670 = vpop.f32.mrf.mxu0
    %v1671 = vadd.f32 0.0, %v1670
    %v1672 = vpop.f32.mrf.mxu0
    %v1673 = vadd.f32 0.0, %v1672
    %1674 = vdwg.mxu0
    %1675 = vmatprep.subr.mxu0 %v115
    %1676 = vmatpush1.msra.mxu0 %v114
    %1677 = vmatprep.subr.mxu0 %v111
    %1678 = vmatpush1.msra.mxu0 %v110
    %1679 = vmatprep.subr.mxu0 %v107
    %1680 = vmatpush1.msra.mxu0 %v106
    %1681 = vmatprep.subr.mxu0 %v103
    %1682 = vmatpush1.msra.mxu0 %v102
    %1683 = vmatprep.subr.mxu0 %v99
    %1684 = vmatpush1.msra.mxu0 %v98
    %1685 = vmatprep.subr.mxu0 %v95
    %1686 = vmatpush1.msra.mxu0 %v94
    %1687 = vmatprep.subr.mxu0 %v91
    %1688 = vmatpush1.msra.mxu0 %v90
    %1689 = vmatprep.subr.mxu0 %v87
    %1690 = vmatpush1.msra.mxu0 %v86
    %1691 = vmatprep.subr.mxu0 %v83
    %1692 = vmatpush1.msra.mxu0 %v82
    %1693 = vmatprep.subr.mxu0 %v79
    %1694 = vmatpush1.msra.mxu0 %v78
    %1695 = vmatprep.subr.mxu0 %v75
    %1696 = vmatpush1.msra.mxu0 %v74
    %1697 = vmatprep.subr.mxu0 %v71
    %1698 = vmatpush1.msra.mxu0 %v70
    %1699 = vmatprep.subr.mxu0 %v67
    %1700 = vmatpush1.msra.mxu0 %v66
    %1701 = vmatprep.subr.mxu0 %v63
    %1702 = vmatpush1.msra.mxu0 %v62
    %1703 = vmatprep.subr.mxu0 %v59
    %1704 = vmatpush1.msra.mxu0 %v58
    %1705 = vmatprep.subr.mxu0 %v55
    %1706 = vmatpush1.msra.mxu0 %v54
    %1707 = vmatprep.subr.mxu0 0.0
    %1708 = vmatpush2.msra.mxu0 0.0
    %1709 = vmatprep.subr.mxu0 0.0
    %1710 = vmatpush2.msra.mxu0 0.0
    %1711 = vmatprep.subr.mxu0 0.0
    %1712 = vmatpush2.msra.mxu0 0.0
    %1713 = vmatprep.subr.mxu0 0.0
    %1714 = vmatpush2.msra.mxu0 0.0
    %1715 = vmatprep.subr.mxu0 0.0
    %1716 = vmatpush2.msra.mxu0 0.0
    %1717 = vmatprep.subr.mxu0 0.0
    %1718 = vmatpush2.msra.mxu0 0.0
    %1719 = vmatprep.subr.mxu0 0.0
    %1720 = vmatpush2.msra.mxu0 0.0
    %1721 = vmatprep.subr.mxu0 0.0
    %1722 = vmatpush2.msra.mxu0 0.0
    %1723 = vmatprep.subr.mxu0 0.0
    %1724 = vmatpush2.msra.mxu0 0.0
    %1725 = vmatprep.subr.mxu0 0.0
    %1726 = vmatpush2.msra.mxu0 0.0
    %1727 = vmatprep.subr.mxu0 0.0
    %1728 = vmatpush2.msra.mxu0 0.0
    %1729 = vmatprep.subr.mxu0 0.0
    %1730 = vmatpush2.msra.mxu0 0.0
    %1731 = vmatprep.subr.mxu0 0.0
    %1732 = vmatpush2.msra.mxu0 0.0
    %1733 = vmatprep.subr.mxu0 0.0
    %1734 = vmatpush2.msra.mxu0 0.0
    %1735 = vmatprep.subr.mxu0 0.0
    %1736 = vmatpush2.msra.mxu0 0.0
    %1737 = vmatprep.subr.mxu0 0.0
    %1738 = vmatpush2.msra.mxu0 0.0
    %1739 = vmatprep.mubr.f32.mxu0 0.0
    %1740 = vmatmul.mubr.f32.gmra.mxu0 %v1603
    %v1741 = vpop.f32.mrf.mxu0
    %v1742 = vadd.f32 0.0, %v1741
    %v1743 = vpop.f32.mrf.mxu0
    %v1744 = vadd.f32 0.0, %v1743
    %1745 = vdwg.mxu0
    %v1746 = vadd.f32 %v297, %v1671
    %v1747 = vadd.f32 %v299, %v1673
    %v1748 = vadd.f32 %v410, %v1742
    %v1749 = vadd.f32 %v412, %v1744
    %v1750 = vxor.u32 %v1746, 2147483648
    %v1751 = vmul.f32 %v1750, 1.442695
    %v1752 = vpow.pop %v1751
    %v1753 = vadd.f32 %v1752, 1.0
    %v1754 = vrcp.pop %v1753
    %v1755 = vmul.f32 1.0, %v1754
    %v1756 = vxor.u32 %v1747, 2147483648
    %v1757 = vmul.f32 %v1756, 1.442695
    %v1758 = vpow.pop %v1757
    %v1759 = vadd.f32 %v1758, 1.0
    %v1760 = vrcp.pop %v1759
    %v1761 = vmul.f32 1.0, %v1760
    %v1762 = vtanh.pop %v1748
    %v1763 = vxor.u32 %v1749, 2147483648
    %v1764 = vmul.f32 %v1763, 1.442695
    %v1765 = vpow.pop %v1764
    %v1766 = vadd.f32 %v1765, 1.0
    %v1767 = vrcp.pop %v1766
    %v1768 = vmul.f32 1.0, %v1767
    %v1769 = vmul.f32 %v1761, %v1601
    %v1770 = vmul.f32 %v1755, %v1762
    %v1771 = vadd.f32 %v1769, %v1770
    %v1772 = vtanh.pop %v1771
    %v1773 = vmul.f32 %v1768, %v1772
    %v1774 = vld [vmem:[#allocation5] sm:$0xff]
    %v1775 = vld [vmem:[#allocation5 + $0x8] sm:$0xff]
    %v1776 = vld [vmem:[#allocation5 + $0x10] sm:$0xff]
    %v1777 = vld [vmem:[#allocation5 + $0x18] sm:$0xff]
    %v1778 = vld [vmem:[#allocation5 + $0x20] sm:$0xff]
    %v1779 = vld [vmem:[#allocation5 + $0x28] sm:$0xff]
    %v1780 = vld [vmem:[#allocation5 + $0x30] sm:$0xff]
    %v1781 = vld [vmem:[#allocation5 + $0x38] sm:$0xff]
    %v1782 = vld [vmem:[#allocation5 + $0x40] sm:$0xff]
    %v1783 = vld [vmem:[#allocation5 + $0x48] sm:$0xff]
    %v1784 = vld [vmem:[#allocation5 + $0x50] sm:$0xff]
    %v1785 = vld [vmem:[#allocation5 + $0x58] sm:$0xff]
    %v1786 = vld [vmem:[#allocation5 + $0x60] sm:$0xff]
    %v1787 = vld [vmem:[#allocation5 + $0x68] sm:$0xff]
    %v1788 = vld [vmem:[#allocation5 + $0x70] sm:$0xff]
    %v1789 = vld [vmem:[#allocation5 + $0x78] sm:$0xff]
    %v1790 = vld [vmem:[%s5] sm:$0x1]
    %v1792 = vlaneseq
    %v1793 = vshrl.u32 %v1792, 7
    %v1794 = vsub.s32 0, %v1793
    %v1795 = vrot.slane %v1790, %v1794
    %1797 = vmatprep.subr.mxu0 0.0
    %1798 = vmatpush1.msra.mxu0 %v1789
    %1799 = vmatprep.subr.mxu0 0.0
    %1800 = vmatpush1.msra.mxu0 %v1788
    %1801 = vmatprep.subr.mxu0 0.0
    %1802 = vmatpush1.msra.mxu0 %v1787
    %1803 = vmatprep.subr.mxu0 0.0
    %1804 = vmatpush1.msra.mxu0 %v1786
    %1805 = vmatprep.subr.mxu0 0.0
    %1806 = vmatpush1.msra.mxu0 %v1785
    %1807 = vmatprep.subr.mxu0 0.0
    %1808 = vmatpush1.msra.mxu0 %v1784
    %1809 = vmatprep.subr.mxu0 0.0
    %1810 = vmatpush1.msra.mxu0 %v1783
    %1811 = vmatprep.subr.mxu0 0.0
    %1812 = vmatpush1.msra.mxu0 %v1782
    %1813 = vmatprep.subr.mxu0 0.0
    %1814 = vmatpush1.msra.mxu0 %v1781
    %1815 = vmatprep.subr.mxu0 0.0
    %1816 = vmatpush1.msra.mxu0 %v1780
    %1817 = vmatprep.subr.mxu0 0.0
    %1818 = vmatpush1.msra.mxu0 %v1779
    %1819 = vmatprep.subr.mxu0 0.0
    %1820 = vmatpush1.msra.mxu0 %v1778
    %1821 = vmatprep.subr.mxu0 0.0
    %1822 = vmatpush1.msra.mxu0 %v1777
    %1823 = vmatprep.subr.mxu0 0.0
    %1824 = vmatpush1.msra.mxu0 %v1776
    %1825 = vmatprep.subr.mxu0 0.0
    %1826 = vmatpush1.msra.mxu0 %v1775
    %1827 = vmatprep.subr.mxu0 0.0
    %1828 = vmatpush1.msra.mxu0 %v1774
    %1829 = vmatprep.subr.mxu0 0.0
    %1830 = vmatpush2.msra.mxu0 0.0
    %1831 = vmatprep.subr.mxu0 0.0
    %1832 = vmatpush2.msra.mxu0 0.0
    %1833 = vmatprep.subr.mxu0 0.0
    %1834 = vmatpush2.msra.mxu0 0.0
    %1835 = vmatprep.subr.mxu0 0.0
    %1836 = vmatpush2.msra.mxu0 0.0
    %1837 = vmatprep.subr.mxu0 0.0
    %1838 = vmatpush2.msra.mxu0 0.0
    %1839 = vmatprep.subr.mxu0 0.0
    %1840 = vmatpush2.msra.mxu0 0.0
    %1841 = vmatprep.subr.mxu0 0.0
    %1842 = vmatpush2.msra.mxu0 0.0
    %1843 = vmatprep.subr.mxu0 0.0
    %1844 = vmatpush2.msra.mxu0 0.0
    %1845 = vmatprep.subr.mxu0 0.0
    %1846 = vmatpush2.msra.mxu0 0.0
    %1847 = vmatprep.subr.mxu0 0.0
    %1848 = vmatpush2.msra.mxu0 0.0
    %1849 = vmatprep.subr.mxu0 0.0
    %1850 = vmatpush2.msra.mxu0 0.0
    %1851 = vmatprep.subr.mxu0 0.0
    %1852 = vmatpush2.msra.mxu0 0.0
    %1853 = vmatprep.subr.mxu0 0.0
    %1854 = vmatpush2.msra.mxu0 0.0
    %1855 = vmatprep.subr.mxu0 0.0
    %1856 = vmatpush2.msra.mxu0 0.0
    %1857 = vmatprep.subr.mxu0 0.0
    %1858 = vmatpush2.msra.mxu0 0.0
    %1859 = vmatprep.subr.mxu0 0.0
    %1860 = vmatpush2.msra.mxu0 0.0
    %1861 = vmatprep.mubr.f32.mxu0 0.0
    %1862 = vmatmul.mubr.f32.gmra.mxu0 %v1773
    %v1863 = vpop.f32.mrf.mxu0
    %v1864 = vadd.f32 %v1795, %v1863
    %v1865 = vpop.f32.mrf.mxu0
    %1866 = vdwg.mxu0
    %1867 = vst [vmem:[#allocation7] sm:$0xff] %v1864
    // Predicated region
    $region34: #{tpu_custom_call.1} parent=1 // pred_check
      _
    $region35: #{tpu_custom_call.1} parent=1 // pred_check_branch
      %1869 = sbr.rel (0) target = $region37
    $region36: #{tpu_custom_call.1} parent=1 // pred_region
      %s1871 = ssub.s32 128, 128
      %1872 = vsyncadd [#allocation4], %s1871
      %s1874 = sshll.u32 [#allocation7], 4
      %s1875 = int_to_ptr.vmem [resolvable:$true] %s1874
      %1877 = dma.vmem_to_hbm [thread:$0]  %s1875, 128, %s6, [#allocation4]
    $region37: #{tpu_custom_call.1} parent=1 // pred_fallthru
      _
    // Predicated region
    $region38: #{tpu_custom_call.1} parent=1 // pred_check
      _
    $region39: #{tpu_custom_call.1} parent=1 // pred_check_branch
      %1879 = sbr.rel (0) target = $region41
    $region40: #{tpu_custom_call.1} parent=1 // pred_region
      %1880 = dma.done [#allocation4], 128
    $region41: #{tpu_custom_call.1} parent=1 // pred_fallthru
      _
    %1881 = vsyncpa [#allocation3], 1
    %1882 = vsyncpa [#allocation6], 1
    %1883 = vsyncpa [#allocation4], 1

</llo_original>
